<compile_context>
chip_gen: v6e
topology: v6e:2x2x1
jax: 0.10.0
libtpu: 0.0.40
codegen_flags: <defaults>
</compile_context>

<pallas_src>
import jax
import jax.numpy as jnp
from jax.experimental import pallas as pl
from jax.experimental.pallas import tpu as pltpu


def _bilinear_matrix(in_size: int, out_size: int, align_corners: bool):
    """Interpolation matrix A (out_size, in_size), PyTorch bilinear semantics."""
    if align_corners:
        if out_size == 1:
            src = jnp.zeros((1,), jnp.float32)
        else:
            src = jnp.arange(out_size, dtype=jnp.float32) * (
                (in_size - 1) / (out_size - 1))
    else:
        scale = in_size / out_size
        src = (jnp.arange(out_size, dtype=jnp.float32) + 0.5) * scale - 0.5
        src = jnp.maximum(src, 0.0)          # PyTorch clamps negative src
    i0 = jnp.clip(jnp.floor(src).astype(jnp.int32), 0, in_size - 1)
    i1 = jnp.clip(i0 + 1, 0, in_size - 1)
    w1 = src - i0.astype(jnp.float32)
    w0 = 1.0 - w1
    oh0 = jax.nn.one_hot(i0, in_size, dtype=jnp.float32)
    oh1 = jax.nn.one_hot(i1, in_size, dtype=jnp.float32)
    return w0[:, None] * oh0 + w1[:, None] * oh1


def _make_decoder_head_kernel(num_stages: int):
    """One batch element: all decoder stages + fused segmentation head.

    Per-stage refs: x (1,C_in,H*W), W (C_dec,C_in), M (H*W,HWc), b (C_dec,1),
    Wf (C_dec,C_dec).  Shared refs: bn_scale/bn_shift (C_dec,1),
    Wp (n_cls,C_dec), bp (n_cls,1).  Output: (1, n_cls, HWc).
    """
    def kernel(*refs):
        stage_refs = refs[:5 * num_stages]
        bn_scale_ref, bn_shift_ref, wp_ref, bp_ref = \
            refs[5 * num_stages:5 * num_stages + 4]
        o_ref = refs[5 * num_stages + 4]

        acc = None
        for s in range(num_stages):
            x_ref, w_ref, m_ref, b_ref, wf_ref = stage_refs[5 * s:5 * s + 5]
            # 1x1 conv at LOW resolution (MXU): (C_dec,C_in)@(C_in,H*W).
            z = jnp.dot(w_ref[...], x_ref[0],
                        preferred_element_type=jnp.float32)
            # Bilinear upsample (align_corners=True) as one lane-dense matmul.
            u = jnp.dot(z, m_ref[...],
                        preferred_element_type=jnp.float32) + b_ref[...]
            # Fuse-conv chunk: replaces the channel concat.
            c = jnp.dot(wf_ref[...], u, preferred_element_type=jnp.float32)
            acc = c if acc is None else acc + c

        y = jnp.maximum(acc, 0.0)                       # ReLU
        y = y * bn_scale_ref[...] + bn_shift_ref[...]   # eval BatchNorm2d
        p = jnp.dot(wp_ref[...], y,
                    preferred_element_type=jnp.float32) + bp_ref[...]
        o_ref[0] = p.astype(o_ref.dtype)
    return kernel


def _resize_kernel(p_ref, ah_ref, awt_ref, o_ref):
    """Final bilinear resize (align_corners=False) for one (batch, class) tile:
    out = Ah @ P @ Aw^T  via two small lane-dense matmuls."""
    t = jnp.dot(ah_ref[...], p_ref[0, 0], preferred_element_type=jnp.float32)
    o = jnp.dot(t, awt_ref[...], preferred_element_type=jnp.float32)
    o_ref[0, 0] = o.astype(o_ref.dtype)


def segformer_decode_head(features, dec_weights, dec_biases, scale_factors,
                          fuse_weight, bn_gamma, bn_beta, bn_mean, bn_var,
                          pred_weight, pred_bias, out_size=(256, 256),
                          bn_eps=1e-5):
    """Mirror of SegFormer.forward from the decoder onward.

    features[i]: (N, C_in_i, H_i, W_i)  (encoder outputs, deepest first)
    dec_weights[i]: (C_dec, C_in_i) or (C_dec, C_in_i, 1, 1); dec_biases[i]: (C_dec,)
    fuse_weight: (C_dec, C_dec*num_stages[,1,1]); bn_*: (C_dec,)
    pred_weight: (num_classes, C_dec[,1,1]); pred_bias: (num_classes,)
    Returns segmentation (N, num_classes, out_size[0], out_size[1]).
    """
    num_stages = len(features)
    N = features[0].shape[0]
    pred_weight = jnp.asarray(pred_weight)
    n_cls = int(pred_weight.shape[0])
    c_dec = int(jnp.asarray(dec_weights[0]).shape[0])

    # Common decoder output resolution (all stages upsample to it).
    h0 = features[0].shape[2] * scale_factors[0]
    w0 = features[0].shape[3] * scale_factors[0]
    hwc = h0 * w0

    fuse_weight = jnp.asarray(fuse_weight).reshape(c_dec, c_dec * num_stages)
    out_dtype = features[0].dtype

    inputs, in_specs = [], []
    flops = 0
    bytes_accessed = 0
    for s_idx, (x, w, b, s) in enumerate(
            zip(features, dec_weights, dec_biases, scale_factors)):
        n, c_in, h, wd = x.shape
        assert n == N, "all stages must share the batch size"
        ho, wo = h * s, wd * s
        assert (ho, wo) == (h0, w0), "stages must reach a common resolution"
        hw = h * wd

        # Flattened separable bilinear matrix (align_corners=True):
        #   M[h*W + w, p*Wo + q] = A_h[p, h] * A_w[q, w]
        a_h = _bilinear_matrix(h, ho, align_corners=True)     # (Ho, H)
        a_w = _bilinear_matrix(wd, wo, align_corners=True)    # (Wo, W)
        m = jnp.einsum("ph,qw->hwpq", a_h, a_w).reshape(hw, hwc)

        x_flat = jnp.asarray(x).reshape(N, c_in, hw)          # lane-dense input
        w2 = jnp.asarray(w).reshape(c_dec, c_in).astype(jnp.float32)
        b2 = jnp.asarray(b).reshape(c_dec, 1).astype(jnp.float32)
        wf = fuse_weight[:, s_idx * c_dec:(s_idx + 1) * c_dec].astype(jnp.float32)

        inputs += [x_flat, w2, m, b2, wf]
        in_specs += [
            pl.BlockSpec((1, c_in, hw), lambda nn: (nn, 0, 0)),
            pl.BlockSpec((c_dec, c_in), lambda nn: (0, 0)),
            pl.BlockSpec((hw, hwc), lambda nn: (0, 0)),
            pl.BlockSpec((c_dec, 1), lambda nn: (0, 0)),
            pl.BlockSpec((c_dec, c_dec), lambda nn: (0, 0)),
        ]
        itm = jnp.dtype(x_flat.dtype).itemsize
        flops += N * (2 * c_dec * c_in * hw + 2 * c_dec * hw * hwc
                      + 2 * c_dec * c_dec * hwc + c_dec * hwc)
        bytes_accessed += (x_flat.size * itm
                           + (w2.size + m.size + b2.size + wf.size) * 4)

    # Eval BatchNorm folded to per-channel scale/shift.
    bn_gamma = jnp.asarray(bn_gamma).astype(jnp.float32)
    bn_var = jnp.asarray(bn_var).astype(jnp.float32)
    bn_scale_v = bn_gamma / jnp.sqrt(bn_var + bn_eps)
    bn_shift_v = jnp.asarray(bn_beta).astype(jnp.float32) \
        - jnp.asarray(bn_mean).astype(jnp.float32) * bn_scale_v
    bn_scale = bn_scale_v.reshape(c_dec, 1)
    bn_shift = bn_shift_v.reshape(c_dec, 1)
    wp = pred_weight.reshape(n_cls, c_dec).astype(jnp.float32)
    bp = jnp.asarray(pred_bias).reshape(n_cls, 1).astype(jnp.float32)

    inputs += [bn_scale, bn_shift, wp, bp]
    in_specs += [
        pl.BlockSpec((c_dec, 1), lambda nn: (0, 0)),
        pl.BlockSpec((c_dec, 1), lambda nn: (0, 0)),
        pl.BlockSpec((n_cls, c_dec), lambda nn: (0, 0)),
        pl.BlockSpec((n_cls, 1), lambda nn: (0, 0)),
    ]
    flops += N * (3 * c_dec * hwc + 2 * n_cls * c_dec * hwc + n_cls * hwc)
    bytes_accessed += int((bn_scale.size + bn_shift.size + wp.size + bp.size) * 4
                          + N * n_cls * hwc * jnp.dtype(out_dtype).itemsize)

    # --- kernel 1: decoder stages + head, fused, grid over batch -------------
    logits = pl.pallas_call(
        _make_decoder_head_kernel(num_stages),
        out_shape=jax.ShapeDtypeStruct((N, n_cls, hwc), out_dtype),
        grid=(N,),
        in_specs=in_specs,
        out_specs=pl.BlockSpec((1, n_cls, hwc), lambda nn: (nn, 0, 0)),
        compiler_params=pltpu.CompilerParams(
            dimension_semantics=("parallel",),
            vmem_limit_bytes=64 * 2**20),
        cost_estimate=pl.CostEstimate(flops=int(flops), transcendentals=0,
                                      bytes_accessed=int(bytes_accessed)),
    )(*inputs)

    # --- kernel 2: final F.interpolate(size=out_size, bilinear, ac=False) ----
    ho, wo = out_size
    a_h = _bilinear_matrix(h0, ho, align_corners=False)        # (Ho, Hc)
    a_wt = _bilinear_matrix(w0, wo, align_corners=False).T     # (Wc, Wo)
    p4 = logits.reshape(N, n_cls, h0, w0)                      # free view
    resize_flops = N * n_cls * (2 * ho * h0 * w0 + 2 * ho * w0 * wo)
    resize_bytes = int((p4.size + a_h.size + a_wt.size) * 4
                       + N * n_cls * ho * wo * jnp.dtype(out_dtype).itemsize)

    seg = pl.pallas_call(
        _resize_kernel,
        out_shape=jax.ShapeDtypeStruct((N, n_cls, ho, wo), out_dtype),
        grid=(N, n_cls),
        in_specs=[
            pl.BlockSpec((1, 1, h0, w0), lambda nn, cc: (nn, cc, 0, 0)),
            pl.BlockSpec((ho, h0), lambda nn, cc: (0, 0)),
            pl.BlockSpec((w0, wo), lambda nn, cc: (0, 0)),
        ],
        out_specs=pl.BlockSpec((1, 1, ho, wo), lambda nn, cc: (nn, cc, 0, 0)),
        compiler_params=pltpu.CompilerParams(
            dimension_semantics=("parallel", "parallel"),
            vmem_limit_bytes=64 * 2**20),
        cost_estimate=pl.CostEstimate(flops=int(resize_flops), transcendentals=0,
                                      bytes_accessed=resize_bytes),
    )(p4, a_h, a_wt)
    return seg


def _reference_forward(features, dec_ws, dec_bs, scales, fuse_w, bn_gamma,
                       bn_beta, bn_mean, bn_var, pred_w, pred_b,
                       out_size=(256, 256), bn_eps=1e-5):
    """Pure-JAX reference in the original PyTorch op order."""
    decoded = []
    for x, w, b, s in zip(features, dec_ws, dec_bs, scales):
        _, _, H, W = x.shape
        ah = _bilinear_matrix(H, H * s, align_corners=True)
        aw = _bilinear_matrix(W, W * s, align_corners=True)
        y = jnp.einsum("ph,nchw,qw->ncpq", ah, x, aw)           # upsample first
        decoded.append(jnp.einsum("oc,ncpq->nopq", w, y)
                       + b[None, :, None, None])                # then 1x1 conv
    xcat = jnp.concatenate(decoded, axis=1)
    f = jnp.einsum("oc,nchw->nohw", fuse_w, xcat)               # fuse (no bias)
    f = jnp.maximum(f, 0.0)                                     # ReLU
    f = (f - bn_mean[None, :, None, None]) \
        / jnp.sqrt(bn_var + bn_eps)[None, :, None, None]
    f = f * bn_gamma[None, :, None, None] + bn_beta[None, :, None, None]
    p = jnp.einsum("oc,nchw->nohw", pred_w, f) + pred_b[None, :, None, None]
    Hc, Wc = p.shape[2], p.shape[3]
    ah = _bilinear_matrix(Hc, out_size[0], align_corners=False)
    aw = _bilinear_matrix(Wc, out_size[1], align_corners=False)
    return jnp.einsum("ph,nchw,qw->ncpq", ah, p, aw)


if __name__ == "__main__":
    key = jax.random.PRNGKey(0)

    # Synthetic small config: decoder receives widths[::-1] (deepest first).
    decoder_channels = 8
    num_classes = 4
    widths_rev = [16, 8, 4]
    scale_factors = [8, 4, 2]
    spatials = [(2, 2), (4, 4), (8, 8)]      # all stages upsample to 16x16
    N = 2
    out_size = (256, 256)

    keys = jax.random.split(key, 2 * len(widths_rev) + 4)
    features, dec_ws, dec_bs = [], [], []
    for i, (c_in, (h, w)) in enumerate(zip(widths_rev, spatials)):
        features.append(
            jax.random.normal(keys[2 * i], (N, c_in, h, w), jnp.float32))
        dec_ws.append(0.1 * jax.random.normal(
            keys[2 * i + 1], (decoder_channels, c_in), jnp.float32))
        dec_bs.append(0.01 * jnp.arange(decoder_channels, dtype=jnp.float32)
                      - 0.02)

    k = 2 * len(widths_rev)
    fuse_w = 0.1 * jax.random.normal(
        keys[k], (decoder_channels, decoder_channels * len(widths_rev)),
        jnp.float32)
    pred_w = 0.1 * jax.random.normal(
        keys[k + 1], (num_classes, decoder_channels), jnp.float32)
    pred_b = 0.01 * jnp.arange(num_classes, dtype=jnp.float32)
    bn_gamma = 1.0 + 0.05 * jnp.arange(decoder_channels, dtype=jnp.float32)
    bn_beta = 0.02 * jnp.arange(decoder_channels, dtype=jnp.float32) - 0.05
    bn_mean = 0.1 * jax.random.normal(keys[k + 2], (decoder_channels,),
                                      jnp.float32)
    bn_var = 0.5 + jax.random.uniform(keys[k + 3], (decoder_channels,),
                                      dtype=jnp.float32)

    seg = segformer_decode_head(features, dec_ws, dec_bs, scale_factors,
                                fuse_w, bn_gamma, bn_beta, bn_mean, bn_var,
                                pred_w, pred_b, out_size=out_size)
    seg = jax.block_until_ready(seg)

    ref = _reference_forward(features, dec_ws, dec_bs, scale_factors, fuse_w,
                             bn_gamma, bn_beta, bn_mean, bn_var, pred_w,
                             pred_b, out_size=out_size)
    assert seg.shape == ref.shape == (N, num_classes) + out_size, \
        (seg.shape, ref.shape)
    max_err = float(jnp.max(jnp.abs(seg - ref)))
    assert jnp.allclose(seg, ref, atol=1e-4, rtol=1e-3), max_err

    print("KERNEL_OK")
</pallas_src>

<mosaic_0001>
module attributes {stable_mosaic.version = 11 : i64} {
  func.func @kernel(%arg0: i32, %arg1: memref<1x16x4xf32, #tpu.memory_space<vmem>>, %arg2: memref<8x16xf32, #tpu.memory_space<vmem>>, %arg3: memref<4x256xf32, #tpu.memory_space<vmem>>, %arg4: memref<8x1xf32, #tpu.memory_space<vmem>>, %arg5: memref<8x8xf32, #tpu.memory_space<vmem>>, %arg6: memref<1x8x16xf32, #tpu.memory_space<vmem>>, %arg7: memref<8x8xf32, #tpu.memory_space<vmem>>, %arg8: memref<16x256xf32, #tpu.memory_space<vmem>>, %arg9: memref<8x1xf32, #tpu.memory_space<vmem>>, %arg10: memref<8x8xf32, #tpu.memory_space<vmem>>, %arg11: memref<1x4x64xf32, #tpu.memory_space<vmem>>, %arg12: memref<8x4xf32, #tpu.memory_space<vmem>>, %arg13: memref<64x256xf32, #tpu.memory_space<vmem>>, %arg14: memref<8x1xf32, #tpu.memory_space<vmem>>, %arg15: memref<8x8xf32, #tpu.memory_space<vmem>>, %arg16: memref<8x1xf32, #tpu.memory_space<vmem>>, %arg17: memref<8x1xf32, #tpu.memory_space<vmem>>, %arg18: memref<4x8xf32, #tpu.memory_space<vmem>>, %arg19: memref<4x1xf32, #tpu.memory_space<vmem>>, %arg20: memref<1x4x256xf32, #tpu.memory_space<vmem>>) attributes {dimension_semantics = [#tpu.dimension_semantics<parallel>], iteration_bounds = array<i64: 2>, scalar_prefetch = 0 : i64, scratch_operands = 0 : i64, tpu.core_type = #tpu.core_type<tc>, window_params = [{transform_indices = @transform_0, window_bounds = array<i64: 1, 16, 4>}, {pipeline_mode = #tpu.pipeline_mode<synchronous>, transform_indices = @transform_1, window_bounds = array<i64: 8, 16>}, {pipeline_mode = #tpu.pipeline_mode<synchronous>, transform_indices = @transform_2, window_bounds = array<i64: 4, 256>}, {pipeline_mode = #tpu.pipeline_mode<synchronous>, transform_indices = @transform_3, window_bounds = array<i64: 8, 1>}, {pipeline_mode = #tpu.pipeline_mode<synchronous>, transform_indices = @transform_4, window_bounds = array<i64: 8, 8>}, {transform_indices = @transform_5, window_bounds = array<i64: 1, 8, 16>}, {pipeline_mode = #tpu.pipeline_mode<synchronous>, transform_indices = @transform_6, window_bounds = array<i64: 8, 8>}, {pipeline_mode = #tpu.pipeline_mode<synchronous>, transform_indices = @transform_7, window_bounds = array<i64: 16, 256>}, {pipeline_mode = #tpu.pipeline_mode<synchronous>, transform_indices = @transform_8, window_bounds = array<i64: 8, 1>}, {pipeline_mode = #tpu.pipeline_mode<synchronous>, transform_indices = @transform_9, window_bounds = array<i64: 8, 8>}, {transform_indices = @transform_10, window_bounds = array<i64: 1, 4, 64>}, {pipeline_mode = #tpu.pipeline_mode<synchronous>, transform_indices = @transform_11, window_bounds = array<i64: 8, 4>}, {pipeline_mode = #tpu.pipeline_mode<synchronous>, transform_indices = @transform_12, window_bounds = array<i64: 64, 256>}, {pipeline_mode = #tpu.pipeline_mode<synchronous>, transform_indices = @transform_13, window_bounds = array<i64: 8, 1>}, {pipeline_mode = #tpu.pipeline_mode<synchronous>, transform_indices = @transform_14, window_bounds = array<i64: 8, 8>}, {pipeline_mode = #tpu.pipeline_mode<synchronous>, transform_indices = @transform_15, window_bounds = array<i64: 8, 1>}, {pipeline_mode = #tpu.pipeline_mode<synchronous>, transform_indices = @transform_16, window_bounds = array<i64: 8, 1>}, {pipeline_mode = #tpu.pipeline_mode<synchronous>, transform_indices = @transform_17, window_bounds = array<i64: 4, 8>}, {pipeline_mode = #tpu.pipeline_mode<synchronous>, transform_indices = @transform_18, window_bounds = array<i64: 4, 1>}, {transform_indices = @transform_19, window_bounds = array<i64: 1, 4, 256>}]} {
    %c0 = arith.constant 0 : index
    %c0_0 = arith.constant 0 : index
    %0 = vector.load %arg2[%c0, %c0_0] : memref<8x16xf32, #tpu.memory_space<vmem>>, vector<8x16xf32>
    %c0_1 = arith.constant 0 : index
    %c0_2 = arith.constant 0 : index
    %c0_3 = arith.constant 0 : index
    %1 = vector.load %arg1[%c0_1, %c0_2, %c0_3] : memref<1x16x4xf32, #tpu.memory_space<vmem>>, vector<1x16x4xf32>
    %2 = vector.shape_cast %1 : vector<1x16x4xf32> to vector<16x4xf32>
    %cst = arith.constant dense<0.000000e+00> : vector<8x4xf32>
    %3 = tpu.matmul %0, %2, %cst {dimension_numbers = #tpu.dot_dimension_numbers<[1], [0], [0], [1], [0, 0, 1, 1], [], []>} : vector<8x16xf32>, vector<16x4xf32>, vector<8x4xf32> -> vector<8x4xf32>
    %c0_4 = arith.constant 0 : index
    %c0_5 = arith.constant 0 : index
    %4 = vector.load %arg3[%c0_4, %c0_5] : memref<4x256xf32, #tpu.memory_space<vmem>>, vector<4x256xf32>
    %cst_6 = arith.constant dense<0.000000e+00> : vector<8x256xf32>
    %5 = tpu.matmul %3, %4, %cst_6 {dimension_numbers = #tpu.dot_dimension_numbers<[1], [0], [0], [1], [0, 0, 1, 1], [], []>} : vector<8x4xf32>, vector<4x256xf32>, vector<8x256xf32> -> vector<8x256xf32>
    %c0_7 = arith.constant 0 : index
    %c0_8 = arith.constant 0 : index
    %6 = vector.load %arg4[%c0_7, %c0_8] : memref<8x1xf32, #tpu.memory_space<vmem>>, vector<8x1xf32>
    %7 = vector.broadcast %6 : vector<8x1xf32> to vector<8x256xf32>
    %8 = arith.addf %5, %7 : vector<8x256xf32>
    %c0_9 = arith.constant 0 : index
    %c0_10 = arith.constant 0 : index
    %9 = vector.load %arg5[%c0_9, %c0_10] : memref<8x8xf32, #tpu.memory_space<vmem>>, vector<8x8xf32>
    %cst_11 = arith.constant dense<0.000000e+00> : vector<8x256xf32>
    %10 = tpu.matmul %9, %8, %cst_11 {dimension_numbers = #tpu.dot_dimension_numbers<[1], [0], [0], [1], [0, 0, 1, 1], [], []>} : vector<8x8xf32>, vector<8x256xf32>, vector<8x256xf32> -> vector<8x256xf32>
    %c0_12 = arith.constant 0 : index
    %c0_13 = arith.constant 0 : index
    %11 = vector.load %arg7[%c0_12, %c0_13] : memref<8x8xf32, #tpu.memory_space<vmem>>, vector<8x8xf32>
    %c0_14 = arith.constant 0 : index
    %c0_15 = arith.constant 0 : index
    %c0_16 = arith.constant 0 : index
    %12 = vector.load %arg6[%c0_14, %c0_15, %c0_16] : memref<1x8x16xf32, #tpu.memory_space<vmem>>, vector<1x8x16xf32>
    %13 = vector.shape_cast %12 : vector<1x8x16xf32> to vector<8x16xf32>
    %cst_17 = arith.constant dense<0.000000e+00> : vector<8x16xf32>
    %14 = tpu.matmul %11, %13, %cst_17 {dimension_numbers = #tpu.dot_dimension_numbers<[1], [0], [0], [1], [0, 0, 1, 1], [], []>} : vector<8x8xf32>, vector<8x16xf32>, vector<8x16xf32> -> vector<8x16xf32>
    %c0_18 = arith.constant 0 : index
    %c0_19 = arith.constant 0 : index
    %15 = vector.load %arg8[%c0_18, %c0_19] : memref<16x256xf32, #tpu.memory_space<vmem>>, vector<16x256xf32>
    %cst_20 = arith.constant dense<0.000000e+00> : vector<8x256xf32>
    %16 = tpu.matmul %14, %15, %cst_20 {dimension_numbers = #tpu.dot_dimension_numbers<[1], [0], [0], [1], [0, 0, 1, 1], [], []>} : vector<8x16xf32>, vector<16x256xf32>, vector<8x256xf32> -> vector<8x256xf32>
    %c0_21 = arith.constant 0 : index
    %c0_22 = arith.constant 0 : index
    %17 = vector.load %arg9[%c0_21, %c0_22] : memref<8x1xf32, #tpu.memory_space<vmem>>, vector<8x1xf32>
    %18 = vector.broadcast %17 : vector<8x1xf32> to vector<8x256xf32>
    %19 = arith.addf %16, %18 : vector<8x256xf32>
    %c0_23 = arith.constant 0 : index
    %c0_24 = arith.constant 0 : index
    %20 = vector.load %arg10[%c0_23, %c0_24] : memref<8x8xf32, #tpu.memory_space<vmem>>, vector<8x8xf32>
    %cst_25 = arith.constant dense<0.000000e+00> : vector<8x256xf32>
    %21 = tpu.matmul %20, %19, %cst_25 {dimension_numbers = #tpu.dot_dimension_numbers<[1], [0], [0], [1], [0, 0, 1, 1], [], []>} : vector<8x8xf32>, vector<8x256xf32>, vector<8x256xf32> -> vector<8x256xf32>
    %22 = arith.addf %10, %21 : vector<8x256xf32>
    %c0_26 = arith.constant 0 : index
    %c0_27 = arith.constant 0 : index
    %23 = vector.load %arg12[%c0_26, %c0_27] : memref<8x4xf32, #tpu.memory_space<vmem>>, vector<8x4xf32>
    %c0_28 = arith.constant 0 : index
    %c0_29 = arith.constant 0 : index
    %c0_30 = arith.constant 0 : index
    %24 = vector.load %arg11[%c0_28, %c0_29, %c0_30] : memref<1x4x64xf32, #tpu.memory_space<vmem>>, vector<1x4x64xf32>
    %25 = vector.shape_cast %24 : vector<1x4x64xf32> to vector<4x64xf32>
    %cst_31 = arith.constant dense<0.000000e+00> : vector<8x64xf32>
    %26 = tpu.matmul %23, %25, %cst_31 {dimension_numbers = #tpu.dot_dimension_numbers<[1], [0], [0], [1], [0, 0, 1, 1], [], []>} : vector<8x4xf32>, vector<4x64xf32>, vector<8x64xf32> -> vector<8x64xf32>
    %c0_32 = arith.constant 0 : index
    %c0_33 = arith.constant 0 : index
    %27 = vector.load %arg13[%c0_32, %c0_33] : memref<64x256xf32, #tpu.memory_space<vmem>>, vector<64x256xf32>
    %cst_34 = arith.constant dense<0.000000e+00> : vector<8x256xf32>
    %28 = tpu.matmul %26, %27, %cst_34 {dimension_numbers = #tpu.dot_dimension_numbers<[1], [0], [0], [1], [0, 0, 1, 1], [], []>} : vector<8x64xf32>, vector<64x256xf32>, vector<8x256xf32> -> vector<8x256xf32>
    %c0_35 = arith.constant 0 : index
    %c0_36 = arith.constant 0 : index
    %29 = vector.load %arg14[%c0_35, %c0_36] : memref<8x1xf32, #tpu.memory_space<vmem>>, vector<8x1xf32>
    %30 = vector.broadcast %29 : vector<8x1xf32> to vector<8x256xf32>
    %31 = arith.addf %28, %30 : vector<8x256xf32>
    %c0_37 = arith.constant 0 : index
    %c0_38 = arith.constant 0 : index
    %32 = vector.load %arg15[%c0_37, %c0_38] : memref<8x8xf32, #tpu.memory_space<vmem>>, vector<8x8xf32>
    %cst_39 = arith.constant dense<0.000000e+00> : vector<8x256xf32>
    %33 = tpu.matmul %32, %31, %cst_39 {dimension_numbers = #tpu.dot_dimension_numbers<[1], [0], [0], [1], [0, 0, 1, 1], [], []>} : vector<8x8xf32>, vector<8x256xf32>, vector<8x256xf32> -> vector<8x256xf32>
    %34 = arith.addf %22, %33 : vector<8x256xf32>
    %cst_40 = arith.constant 0.000000e+00 : f32
    %35 = vector.broadcast %cst_40 : f32 to vector<8x256xf32>
    %36 = arith.maximumf %34, %35 : vector<8x256xf32>
    %c0_41 = arith.constant 0 : index
    %c0_42 = arith.constant 0 : index
    %37 = vector.load %arg16[%c0_41, %c0_42] : memref<8x1xf32, #tpu.memory_space<vmem>>, vector<8x1xf32>
    %38 = vector.broadcast %37 : vector<8x1xf32> to vector<8x256xf32>
    %39 = arith.mulf %36, %38 : vector<8x256xf32>
    %c0_43 = arith.constant 0 : index
    %c0_44 = arith.constant 0 : index
    %40 = vector.load %arg17[%c0_43, %c0_44] : memref<8x1xf32, #tpu.memory_space<vmem>>, vector<8x1xf32>
    %41 = vector.broadcast %40 : vector<8x1xf32> to vector<8x256xf32>
    %42 = arith.addf %39, %41 : vector<8x256xf32>
    %c0_45 = arith.constant 0 : index
    %c0_46 = arith.constant 0 : index
    %43 = vector.load %arg18[%c0_45, %c0_46] : memref<4x8xf32, #tpu.memory_space<vmem>>, vector<4x8xf32>
    %cst_47 = arith.constant dense<0.000000e+00> : vector<4x256xf32>
    %44 = tpu.matmul %43, %42, %cst_47 {dimension_numbers = #tpu.dot_dimension_numbers<[1], [0], [0], [1], [0, 0, 1, 1], [], []>} : vector<4x8xf32>, vector<8x256xf32>, vector<4x256xf32> -> vector<4x256xf32>
    %c0_48 = arith.constant 0 : index
    %c0_49 = arith.constant 0 : index
    %45 = vector.load %arg19[%c0_48, %c0_49] : memref<4x1xf32, #tpu.memory_space<vmem>>, vector<4x1xf32>
    %46 = vector.broadcast %45 : vector<4x1xf32> to vector<4x256xf32>
    %47 = arith.addf %44, %46 : vector<4x256xf32>
    %c0_50 = arith.constant 0 : index
    %c0_51 = arith.constant 0 : index
    %c0_52 = arith.constant 0 : index
    %48 = vector.load %arg20[%c0_50, %c0_51, %c0_52] : memref<1x4x256xf32, #tpu.memory_space<vmem>>, vector<1x4x256xf32>
    %49 = vector.shape_cast %48 : vector<1x4x256xf32> to vector<4x256xf32>
    %50 = vector.shape_cast %47 : vector<4x256xf32> to vector<1x4x256xf32>
    tpu.vector_store %arg20[%c0_50, %c0_51, %c0_52], %50 {strides = array<i32>} : memref<1x4x256xf32, #tpu.memory_space<vmem>>, vector<1x4x256xf32>,
    return
  }
  func.func @transform_0(%arg0: i32) -> (i32, i32, i32) {
    %c0_i32 = arith.constant 0 : i32
    %c0_i32_0 = arith.constant 0 : i32
    %c0_i32_1 = arith.constant 0 : i32
    return %arg0, %c0_i32, %c0_i32_0 : i32, i32, i32
  }
  func.func @transform_1(%arg0: i32) -> (i32, i32) {
    %c0_i32 = arith.constant 0 : i32
    %c0_i32_0 = arith.constant 0 : i32
    %c0_i32_1 = arith.constant 0 : i32
    return %c0_i32, %c0_i32_0 : i32, i32
  }
  func.func @transform_2(%arg0: i32) -> (i32, i32) {
    %c0_i32 = arith.constant 0 : i32
    %c0_i32_0 = arith.constant 0 : i32
    %c0_i32_1 = arith.constant 0 : i32
    return %c0_i32, %c0_i32_0 : i32, i32
  }
  func.func @transform_3(%arg0: i32) -> (i32, i32) {
    %c0_i32 = arith.constant 0 : i32
    %c0_i32_0 = arith.constant 0 : i32
    %c0_i32_1 = arith.constant 0 : i32
    return %c0_i32, %c0_i32_0 : i32, i32
  }
  func.func @transform_4(%arg0: i32) -> (i32, i32) {
    %c0_i32 = arith.constant 0 : i32
    %c0_i32_0 = arith.constant 0 : i32
    %c0_i32_1 = arith.constant 0 : i32
    return %c0_i32, %c0_i32_0 : i32, i32
  }
  func.func @transform_5(%arg0: i32) -> (i32, i32, i32) {
    %c0_i32 = arith.constant 0 : i32
    %c0_i32_0 = arith.constant 0 : i32
    %c0_i32_1 = arith.constant 0 : i32
    return %arg0, %c0_i32, %c0_i32_0 : i32, i32, i32
  }
  func.func @transform_6(%arg0: i32) -> (i32, i32) {
    %c0_i32 = arith.constant 0 : i32
    %c0_i32_0 = arith.constant 0 : i32
    %c0_i32_1 = arith.constant 0 : i32
    return %c0_i32, %c0_i32_0 : i32, i32
  }
  func.func @transform_7(%arg0: i32) -> (i32, i32) {
    %c0_i32 = arith.constant 0 : i32
    %c0_i32_0 = arith.constant 0 : i32
    %c0_i32_1 = arith.constant 0 : i32
    return %c0_i32, %c0_i32_0 : i32, i32
  }
  func.func @transform_8(%arg0: i32) -> (i32, i32) {
    %c0_i32 = arith.constant 0 : i32
    %c0_i32_0 = arith.constant 0 : i32
    %c0_i32_1 = arith.constant 0 : i32
    return %c0_i32, %c0_i32_0 : i32, i32
  }
  func.func @transform_9(%arg0: i32) -> (i32, i32) {
    %c0_i32 = arith.constant 0 : i32
    %c0_i32_0 = arith.constant 0 : i32
    %c0_i32_1 = arith.constant 0 : i32
    return %c0_i32, %c0_i32_0 : i32, i32
  }
  func.func @transform_10(%arg0: i32) -> (i32, i32, i32) {
    %c0_i32 = arith.constant 0 : i32
    %c0_i32_0 = arith.constant 0 : i32
    %c0_i32_1 = arith.constant 0 : i32
    return %arg0, %c0_i32, %c0_i32_0 : i32, i32, i32
  }
  func.func @transform_11(%arg0: i32) -> (i32, i32) {
    %c0_i32 = arith.constant 0 : i32
    %c0_i32_0 = arith.constant 0 : i32
    %c0_i32_1 = arith.constant 0 : i32
    return %c0_i32, %c0_i32_0 : i32, i32
  }
  func.func @transform_12(%arg0: i32) -> (i32, i32) {
    %c0_i32 = arith.constant 0 : i32
    %c0_i32_0 = arith.constant 0 : i32
    %c0_i32_1 = arith.constant 0 : i32
    return %c0_i32, %c0_i32_0 : i32, i32
  }
  func.func @transform_13(%arg0: i32) -> (i32, i32) {
    %c0_i32 = arith.constant 0 : i32
    %c0_i32_0 = arith.constant 0 : i32
    %c0_i32_1 = arith.constant 0 : i32
    return %c0_i32, %c0_i32_0 : i32, i32
  }
  func.func @transform_14(%arg0: i32) -> (i32, i32) {
    %c0_i32 = arith.constant 0 : i32
    %c0_i32_0 = arith.constant 0 : i32
    %c0_i32_1 = arith.constant 0 : i32
    return %c0_i32, %c0_i32_0 : i32, i32
  }
  func.func @transform_15(%arg0: i32) -> (i32, i32) {
    %c0_i32 = arith.constant 0 : i32
    %c0_i32_0 = arith.constant 0 : i32
    %c0_i32_1 = arith.constant 0 : i32
    return %c0_i32, %c0_i32_0 : i32, i32
  }
  func.func @transform_16(%arg0: i32) -> (i32, i32) {
    %c0_i32 = arith.constant 0 : i32
    %c0_i32_0 = arith.constant 0 : i32
    %c0_i32_1 = arith.constant 0 : i32
    return %c0_i32, %c0_i32_0 : i32, i32
  }
  func.func @transform_17(%arg0: i32) -> (i32, i32) {
    %c0_i32 = arith.constant 0 : i32
    %c0_i32_0 = arith.constant 0 : i32
    %c0_i32_1 = arith.constant 0 : i32
    return %c0_i32, %c0_i32_0 : i32, i32
  }
  func.func @transform_18(%arg0: i32) -> (i32, i32) {
    %c0_i32 = arith.constant 0 : i32
    %c0_i32_0 = arith.constant 0 : i32
    %c0_i32_1 = arith.constant 0 : i32
    return %c0_i32, %c0_i32_0 : i32, i32
  }
  func.func @transform_19(%arg0: i32) -> (i32, i32, i32) {
    %c0_i32 = arith.constant 0 : i32
    %c0_i32_0 = arith.constant 0 : i32
    %c0_i32_1 = arith.constant 0 : i32
    return %arg0, %c0_i32, %c0_i32_0 : i32, i32, i32
  }
}

</mosaic_0001>

<llo_original>
// kernel: tpu_custom_call.1
$region0: #{tpu_custom_call.1}
  #allocation0 [shape = 'u32[]', space=smem, size = 0x4, offset = 0x4, fixed_abs, tag = 'smem constant byte address 0x4 - core index']
  #allocation1 [shape = 'u32[144,128]{1,0:T(1,128)}', space=vmem, size = 0x12000, scoped, tag = 'internal scratch']
  %s0 = inlined_call_operand.vmem [shape: f32[2,16,4], index: 0, kind: input, shape index: {}]
  %s1 = inlined_call_operand.vmem [shape: f32[8,16], index: 1, kind: input, shape index: {}]
  %s2 = inlined_call_operand.vmem [shape: f32[4,256], index: 2, kind: input, shape index: {}]
  %s3 = inlined_call_operand.vmem [shape: f32[8,1], index: 3, kind: input, shape index: {}]
  %s4 = inlined_call_operand.vmem [shape: f32[8,8], index: 4, kind: input, shape index: {}]
  %s5 = inlined_call_operand.vmem [shape: f32[2,8,16], index: 5, kind: input, shape index: {}]
  %s6 = inlined_call_operand.vmem [shape: f32[8,8], index: 6, kind: input, shape index: {}]
  %s7 = inlined_call_operand.vmem [shape: f32[16,256], index: 7, kind: input, shape index: {}]
  %s8 = inlined_call_operand.vmem [shape: f32[8,1], index: 8, kind: input, shape index: {}]
  %s9 = inlined_call_operand.vmem [shape: f32[8,8], index: 9, kind: input, shape index: {}]
  %s10 = inlined_call_operand.vmem [shape: f32[2,4,64], index: 10, kind: input, shape index: {}]
  %s11 = inlined_call_operand.vmem [shape: f32[8,4], index: 11, kind: input, shape index: {}]
  %s12 = inlined_call_operand.hbm [shape: f32[64,256], index: 12, kind: input, shape index: {}]
  %s13 = inlined_call_operand.vmem [shape: f32[8,1], index: 13, kind: input, shape index: {}]
  %s14 = inlined_call_operand.vmem [shape: f32[8,8], index: 14, kind: input, shape index: {}]
  %s15 = inlined_call_operand.vmem [shape: f32[8,1], index: 15, kind: input, shape index: {}]
  %s16 = inlined_call_operand.vmem [shape: f32[8,1], index: 16, kind: input, shape index: {}]
  %s17 = inlined_call_operand.vmem [shape: f32[4,8], index: 17, kind: input, shape index: {}]
  %s18 = inlined_call_operand.vmem [shape: f32[4,1], index: 18, kind: input, shape index: {}]
  %s19 = inlined_call_operand.hbm [shape: f32[2,4,256], index: 19, kind: output, shape index: {}]
  %s20 = sld [smem:[#allocation0]]
  $region113: #{tpu_custom_call.1} parent=0
    _
  %s22 = ssub.s32 1, %s20
  %s23 = scalar_select 0, %s22, %s20
  $region1: #{tpu_custom_call.1} parent=0
    #allocation2 [shape = 'u8[65536]{0}', space=vmem, size = 0x10000, scoped, tag = 'input window, operand 12, single buffered']
    #allocation3 [shape = 's32[2]{0}', space=sflag, size = 0x8, scoped, tag = 'scoped memory for tpu_custom_call.1']
    #allocation4 [shape = 's32[2]{0}', space=sflag, size = 0x8, scoped, tag = 'scoped memory for tpu_custom_call.1']
    #allocation5 [shape = 'u8[8192]{0}', space=vmem, size = 0x2000, scoped, tag = 'output window, operand 0']
    %24 = vsyncpa [#allocation3], 0
    %25 = vsyncpa [#allocation4], 0
    %s26 = scalar_lea.sflag [#allocation4], 1
    %27 = vsyncpa %s26, 0
    loop: start=0, step=1, limit=4
    $region2: #{tpu_custom_call.1} parent=1 // loop_pre_header
      _
    $region3: #{tpu_custom_call.1} parent=1 // loop_header
      %s29 = sphi 0, %s33
      %p30 = scmp.ge.s32.totalorder %s29, 4
      %s39 = sphi 0, %s41
      %s42 = sphi 0, %s39
      %s43 = sphi 0, %s42
      %s59 = sphi 0, %s43
      %s63 = sphi 0, %s63
      %s65 = sphi 0, %s63
      %s66 = sphi 0, %s65
      %s80 = sphi 0, %s66
      %s84 = sphi 0, %s84
      %s86 = sphi 0, %s84
      %s87 = sphi 0, %s86
      %s101 = sphi 0, %s87
      %s105 = sphi 0, %s105
      %s107 = sphi 0, %s105
      %s108 = sphi 0, %s107
      %s122 = sphi 0, %s108
      %s126 = sphi 0, %s126
      %s128 = sphi 0, %s126
      %s129 = sphi 0, %s128
      %s143 = sphi 0, %s129
      %s149 = sphi 0, %s151
      %s152 = sphi 0, %s149
      %s153 = sphi 0, %s152
      %s169 = sphi 0, %s153
      %s173 = sphi 0, %s173
      %s175 = sphi 0, %s173
      %s176 = sphi 0, %s175
      %s190 = sphi 0, %s176
      %s194 = sphi 0, %s194
      %s196 = sphi 0, %s194
      %s197 = sphi 0, %s196
      %s211 = sphi 0, %s197
      %s215 = sphi 0, %s215
      %s217 = sphi 0, %s215
      %s218 = sphi 0, %s217
      %s232 = sphi 0, %s218
      %s236 = sphi 0, %s236
      %s238 = sphi 0, %s236
      %s239 = sphi 0, %s238
      %s253 = sphi 0, %s239
      %s259 = sphi 0, %s261
      %s262 = sphi 0, %s259
      %s263 = sphi 0, %s262
      %s279 = sphi 0, %s263
      %s283 = sphi 0, %s283
      %s285 = sphi 0, %s283
      %s286 = sphi 0, %s285
      %s300 = sphi 0, %s286
      %s304 = sphi 0, %s304
      %s306 = sphi 0, %s304
      %s307 = sphi 0, %s306
      %s321 = sphi 0, %s307
      %s325 = sphi 0, %s325
      %s327 = sphi 0, %s325
      %s328 = sphi 0, %s327
      %s342 = sphi 0, %s328
      %s346 = sphi 0, %s346
      %s348 = sphi 0, %s346
      %s349 = sphi 0, %s348
      %s363 = sphi 0, %s349
      %s367 = sphi 0, %s367
      %s369 = sphi 0, %s367
      %s370 = sphi 0, %s369
      %s384 = sphi 0, %s370
      %s388 = sphi 0, %s388
      %s390 = sphi 0, %s388
      %s391 = sphi 0, %s390
      %s405 = sphi 0, %s391
      %s409 = sphi 0, %s409
      %s411 = sphi 0, %s409
      %s412 = sphi 0, %s411
      %s426 = sphi 0, %s412
      %s430 = sphi 0, %s430
      %s432 = sphi 0, %s430
      %s433 = sphi 0, %s432
      %s447 = sphi 0, %s433
      %s453 = sphi 0, %s455
      %s456 = sphi 0, %s453
      %s457 = sphi 0, %s456
      %s473 = sphi 0, %s457
    $region4: #{tpu_custom_call.1} parent=1 // loop_header_branch
      %32 = sbr.rel (%p30) target = $region8
    $region5: #{tpu_custom_call.1} parent=1 // loop_body
      %s34 = ssub.s32 %s29, 1
      %s35 = ssub.s32 %s29, 2
      %s36 = sadd.s32 %s29, 1
      %s37 = ssub.s32 %s29, %s36
      %p38 = scmp.eq.s32.totalorder %s37, 0
      %s40 = sadd.s32 %s39, 1
      %s41 = scalar_select %p38, %s39, %s40
      %p44 = pneg %p38
      %p45 = scmp.eq.s32.totalorder %s29, 1
      %p46 = por %p44, %p45
      %p47 = scmp.ne.s32.totalorder %s39, %s42
      %p48 = scmp.eq.s32.totalorder %s29, 0
      %p49 = por %p47, %p48
      %p50 = scmp.ne.s32.totalorder %s39, %s42
      %p51 = scmp.eq.s32.totalorder %s34, 1
      %p52 = por %p50, %p51
      %p53 = scmp.ne.s32.totalorder %s42, %s43
      %p54 = scmp.eq.s32.totalorder %s34, 0
      %p55 = por %p53, %p54
      %p56 = scmp.ne.s32.totalorder %s42, %s43
      %p57 = scmp.eq.s32.totalorder %s35, 1
      %p58 = por %p56, %p57
      %p60 = scmp.ne.s32.totalorder %s43, %s59
      %p61 = scmp.eq.s32.totalorder %s35, 0
      %p62 = por %p60, %p61
      %s64 = sadd.s32 %s63, 1
      %p67 = scmp.eq.s32.totalorder %s29, 1
      %p68 = scmp.ne.s32.totalorder %s63, %s65
      %p69 = scmp.eq.s32.totalorder %s29, 0
      %p70 = por %p68, %p69
      %p71 = scmp.ne.s32.totalorder %s63, %s65
      %p72 = scmp.eq.s32.totalorder %s34, 1
      %p73 = por %p71, %p72
      %p74 = scmp.ne.s32.totalorder %s65, %s66
      %p75 = scmp.eq.s32.totalorder %s34, 0
      %p76 = por %p74, %p75
      %p77 = scmp.ne.s32.totalorder %s65, %s66
      %p78 = scmp.eq.s32.totalorder %s35, 1
      %p79 = por %p77, %p78
      %p81 = scmp.ne.s32.totalorder %s66, %s80
      %p82 = scmp.eq.s32.totalorder %s35, 0
      %p83 = por %p81, %p82
      %s85 = sadd.s32 %s84, 1
      %p88 = scmp.eq.s32.totalorder %s29, 1
      %p89 = scmp.ne.s32.totalorder %s84, %s86
      %p90 = scmp.eq.s32.totalorder %s29, 0
      %p91 = por %p89, %p90
      %p92 = scmp.ne.s32.totalorder %s84, %s86
      %p93 = scmp.eq.s32.totalorder %s34, 1
      %p94 = por %p92, %p93
      %p95 = scmp.ne.s32.totalorder %s86, %s87
      %p96 = scmp.eq.s32.totalorder %s34, 0
      %p97 = por %p95, %p96
      %p98 = scmp.ne.s32.totalorder %s86, %s87
      %p99 = scmp.eq.s32.totalorder %s35, 1
      %p100 = por %p98, %p99
      %p102 = scmp.ne.s32.totalorder %s87, %s101
      %p103 = scmp.eq.s32.totalorder %s35, 0
      %p104 = por %p102, %p103
      %s106 = sadd.s32 %s105, 1
      %p109 = scmp.eq.s32.totalorder %s29, 1
      %p110 = scmp.ne.s32.totalorder %s105, %s107
      %p111 = scmp.eq.s32.totalorder %s29, 0
      %p112 = por %p110, %p111
      %p113 = scmp.ne.s32.totalorder %s105, %s107
      %p114 = scmp.eq.s32.totalorder %s34, 1
      %p115 = por %p113, %p114
      %p116 = scmp.ne.s32.totalorder %s107, %s108
      %p117 = scmp.eq.s32.totalorder %s34, 0
      %p118 = por %p116, %p117
      %p119 = scmp.ne.s32.totalorder %s107, %s108
      %p120 = scmp.eq.s32.totalorder %s35, 1
      %p121 = por %p119, %p120
      %p123 = scmp.ne.s32.totalorder %s108, %s122
      %p124 = scmp.eq.s32.totalorder %s35, 0
      %p125 = por %p123, %p124
      %s127 = sadd.s32 %s126, 1
      %p130 = scmp.eq.s32.totalorder %s29, 1
      %p131 = scmp.ne.s32.totalorder %s126, %s128
      %p132 = scmp.eq.s32.totalorder %s29, 0
      %p133 = por %p131, %p132
      %p134 = scmp.ne.s32.totalorder %s126, %s128
      %p135 = scmp.eq.s32.totalorder %s34, 1
      %p136 = por %p134, %p135
      %p137 = scmp.ne.s32.totalorder %s128, %s129
      %p138 = scmp.eq.s32.totalorder %s34, 0
      %p139 = por %p137, %p138
      %p140 = scmp.ne.s32.totalorder %s128, %s129
      %p141 = scmp.eq.s32.totalorder %s35, 1
      %p142 = por %p140, %p141
      %p144 = scmp.ne.s32.totalorder %s129, %s143
      %p145 = scmp.eq.s32.totalorder %s35, 0
      %p146 = por %p144, %p145
      %s147 = ssub.s32 %s29, %s36
      %p148 = scmp.eq.s32.totalorder %s147, 0
      %s150 = sadd.s32 %s149, 1
      %s151 = scalar_select %p148, %s149, %s150
      %p154 = pneg %p148
      %p155 = scmp.eq.s32.totalorder %s29, 1
      %p156 = por %p154, %p155
      %p157 = scmp.ne.s32.totalorder %s149, %s152
      %p158 = scmp.eq.s32.totalorder %s29, 0
      %p159 = por %p157, %p158
      %p160 = scmp.ne.s32.totalorder %s149, %s152
      %p161 = scmp.eq.s32.totalorder %s34, 1
      %p162 = por %p160, %p161
      %p163 = scmp.ne.s32.totalorder %s152, %s153
      %p164 = scmp.eq.s32.totalorder %s34, 0
      %p165 = por %p163, %p164
      %p166 = scmp.ne.s32.totalorder %s152, %s153
      %p167 = scmp.eq.s32.totalorder %s35, 1
      %p168 = por %p166, %p167
      %p170 = scmp.ne.s32.totalorder %s153, %s169
      %p171 = scmp.eq.s32.totalorder %s35, 0
      %p172 = por %p170, %p171
      %s174 = sadd.s32 %s173, 1
      %p177 = scmp.eq.s32.totalorder %s29, 1
      %p178 = scmp.ne.s32.totalorder %s173, %s175
      %p179 = scmp.eq.s32.totalorder %s29, 0
      %p180 = por %p178, %p179
      %p181 = scmp.ne.s32.totalorder %s173, %s175
      %p182 = scmp.eq.s32.totalorder %s34, 1
      %p183 = por %p181, %p182
      %p184 = scmp.ne.s32.totalorder %s175, %s176
      %p185 = scmp.eq.s32.totalorder %s34, 0
      %p186 = por %p184, %p185
      %p187 = scmp.ne.s32.totalorder %s175, %s176
      %p188 = scmp.eq.s32.totalorder %s35, 1
      %p189 = por %p187, %p188
      %p191 = scmp.ne.s32.totalorder %s176, %s190
      %p192 = scmp.eq.s32.totalorder %s35, 0
      %p193 = por %p191, %p192
      %s195 = sadd.s32 %s194, 1
      %p198 = scmp.eq.s32.totalorder %s29, 1
      %p199 = scmp.ne.s32.totalorder %s194, %s196
      %p200 = scmp.eq.s32.totalorder %s29, 0
      %p201 = por %p199, %p200
      %p202 = scmp.ne.s32.totalorder %s194, %s196
      %p203 = scmp.eq.s32.totalorder %s34, 1
      %p204 = por %p202, %p203
      %p205 = scmp.ne.s32.totalorder %s196, %s197
      %p206 = scmp.eq.s32.totalorder %s34, 0
      %p207 = por %p205, %p206
      %p208 = scmp.ne.s32.totalorder %s196, %s197
      %p209 = scmp.eq.s32.totalorder %s35, 1
      %p210 = por %p208, %p209
      %p212 = scmp.ne.s32.totalorder %s197, %s211
      %p213 = scmp.eq.s32.totalorder %s35, 0
      %p214 = por %p212, %p213
      %s216 = sadd.s32 %s215, 1
      %p219 = scmp.eq.s32.totalorder %s29, 1
      %p220 = scmp.ne.s32.totalorder %s215, %s217
      %p221 = scmp.eq.s32.totalorder %s29, 0
      %p222 = por %p220, %p221
      %p223 = scmp.ne.s32.totalorder %s215, %s217
      %p224 = scmp.eq.s32.totalorder %s34, 1
      %p225 = por %p223, %p224
      %p226 = scmp.ne.s32.totalorder %s217, %s218
      %p227 = scmp.eq.s32.totalorder %s34, 0
      %p228 = por %p226, %p227
      %p229 = scmp.ne.s32.totalorder %s217, %s218
      %p230 = scmp.eq.s32.totalorder %s35, 1
      %p231 = por %p229, %p230
      %p233 = scmp.ne.s32.totalorder %s218, %s232
      %p234 = scmp.eq.s32.totalorder %s35, 0
      %p235 = por %p233, %p234
      %s237 = sadd.s32 %s236, 1
      %p240 = scmp.eq.s32.totalorder %s29, 1
      %p241 = scmp.ne.s32.totalorder %s236, %s238
      %p242 = scmp.eq.s32.totalorder %s29, 0
      %p243 = por %p241, %p242
      %p244 = scmp.ne.s32.totalorder %s236, %s238
      %p245 = scmp.eq.s32.totalorder %s34, 1
      %p246 = por %p244, %p245
      %p247 = scmp.ne.s32.totalorder %s238, %s239
      %p248 = scmp.eq.s32.totalorder %s34, 0
      %p249 = por %p247, %p248
      %p250 = scmp.ne.s32.totalorder %s238, %s239
      %p251 = scmp.eq.s32.totalorder %s35, 1
      %p252 = por %p250, %p251
      %p254 = scmp.ne.s32.totalorder %s239, %s253
      %p255 = scmp.eq.s32.totalorder %s35, 0
      %p256 = por %p254, %p255
      %s257 = ssub.s32 %s29, %s36
      %p258 = scmp.eq.s32.totalorder %s257, 0
      %s260 = sadd.s32 %s259, 1
      %s261 = scalar_select %p258, %s259, %s260
      %p264 = pneg %p258
      %p265 = scmp.eq.s32.totalorder %s29, 1
      %p266 = por %p264, %p265
      %p267 = scmp.ne.s32.totalorder %s259, %s262
      %p268 = scmp.eq.s32.totalorder %s29, 0
      %p269 = por %p267, %p268
      %p270 = scmp.ne.s32.totalorder %s259, %s262
      %p271 = scmp.eq.s32.totalorder %s34, 1
      %p272 = por %p270, %p271
      %p273 = scmp.ne.s32.totalorder %s262, %s263
      %p274 = scmp.eq.s32.totalorder %s34, 0
      %p275 = por %p273, %p274
      %p276 = scmp.ne.s32.totalorder %s262, %s263
      %p277 = scmp.eq.s32.totalorder %s35, 1
      %p278 = por %p276, %p277
      %p280 = scmp.ne.s32.totalorder %s263, %s279
      %p281 = scmp.eq.s32.totalorder %s35, 0
      %p282 = por %p280, %p281
      %s284 = sadd.s32 %s283, 1
      %p287 = scmp.eq.s32.totalorder %s29, 1
      %p288 = scmp.ne.s32.totalorder %s283, %s285
      %p289 = scmp.eq.s32.totalorder %s29, 0
      %p290 = por %p288, %p289
      %p291 = scmp.ne.s32.totalorder %s283, %s285
      %p292 = scmp.eq.s32.totalorder %s34, 1
      %p293 = por %p291, %p292
      %p294 = scmp.ne.s32.totalorder %s285, %s286
      %p295 = scmp.eq.s32.totalorder %s34, 0
      %p296 = por %p294, %p295
      %p297 = scmp.ne.s32.totalorder %s285, %s286
      %p298 = scmp.eq.s32.totalorder %s35, 1
      %p299 = por %p297, %p298
      %p301 = scmp.ne.s32.totalorder %s286, %s300
      %p302 = scmp.eq.s32.totalorder %s35, 0
      %p303 = por %p301, %p302
      %s305 = sadd.s32 %s304, 1
      %p308 = scmp.eq.s32.totalorder %s29, 1
      %p309 = scmp.ne.s32.totalorder %s304, %s306
      %p310 = scmp.eq.s32.totalorder %s29, 0
      %p311 = por %p309, %p310
      %p312 = scmp.ne.s32.totalorder %s304, %s306
      %p313 = scmp.eq.s32.totalorder %s34, 1
      %p314 = por %p312, %p313
      %p315 = scmp.ne.s32.totalorder %s306, %s307
      %p316 = scmp.eq.s32.totalorder %s34, 0
      %p317 = por %p315, %p316
      %p318 = scmp.ne.s32.totalorder %s306, %s307
      %p319 = scmp.eq.s32.totalorder %s35, 1
      %p320 = por %p318, %p319
      %p322 = scmp.ne.s32.totalorder %s307, %s321
      %p323 = scmp.eq.s32.totalorder %s35, 0
      %p324 = por %p322, %p323
      %s326 = sadd.s32 %s325, 1
      %p329 = scmp.eq.s32.totalorder %s29, 1
      %p330 = scmp.ne.s32.totalorder %s325, %s327
      %p331 = scmp.eq.s32.totalorder %s29, 0
      %p332 = por %p330, %p331
      %p333 = scmp.ne.s32.totalorder %s325, %s327
      %p334 = scmp.eq.s32.totalorder %s34, 1
      %p335 = por %p333, %p334
      %p336 = scmp.ne.s32.totalorder %s327, %s328
      %p337 = scmp.eq.s32.totalorder %s34, 0
      %p338 = por %p336, %p337
      %p339 = scmp.ne.s32.totalorder %s327, %s328
      %p340 = scmp.eq.s32.totalorder %s35, 1
      %p341 = por %p339, %p340
      %p343 = scmp.ne.s32.totalorder %s328, %s342
      %p344 = scmp.eq.s32.totalorder %s35, 0
      %p345 = por %p343, %p344
      %s347 = sadd.s32 %s346, 1
      %p350 = scmp.eq.s32.totalorder %s29, 1
      %p351 = scmp.ne.s32.totalorder %s346, %s348
      %p352 = scmp.eq.s32.totalorder %s29, 0
      %p353 = por %p351, %p352
      %p354 = scmp.ne.s32.totalorder %s346, %s348
      %p355 = scmp.eq.s32.totalorder %s34, 1
      %p356 = por %p354, %p355
      %p357 = scmp.ne.s32.totalorder %s348, %s349
      %p358 = scmp.eq.s32.totalorder %s34, 0
      %p359 = por %p357, %p358
      %p360 = scmp.ne.s32.totalorder %s348, %s349
      %p361 = scmp.eq.s32.totalorder %s35, 1
      %p362 = por %p360, %p361
      %p364 = scmp.ne.s32.totalorder %s349, %s363
      %p365 = scmp.eq.s32.totalorder %s35, 0
      %p366 = por %p364, %p365
      %s368 = sadd.s32 %s367, 1
      %p371 = scmp.eq.s32.totalorder %s29, 1
      %p372 = scmp.ne.s32.totalorder %s367, %s369
      %p373 = scmp.eq.s32.totalorder %s29, 0
      %p374 = por %p372, %p373
      %p375 = scmp.ne.s32.totalorder %s367, %s369
      %p376 = scmp.eq.s32.totalorder %s34, 1
      %p377 = por %p375, %p376
      %p378 = scmp.ne.s32.totalorder %s369, %s370
      %p379 = scmp.eq.s32.totalorder %s34, 0
      %p380 = por %p378, %p379
      %p381 = scmp.ne.s32.totalorder %s369, %s370
      %p382 = scmp.eq.s32.totalorder %s35, 1
      %p383 = por %p381, %p382
      %p385 = scmp.ne.s32.totalorder %s370, %s384
      %p386 = scmp.eq.s32.totalorder %s35, 0
      %p387 = por %p385, %p386
      %s389 = sadd.s32 %s388, 1
      %p392 = scmp.eq.s32.totalorder %s29, 1
      %p393 = scmp.ne.s32.totalorder %s388, %s390
      %p394 = scmp.eq.s32.totalorder %s29, 0
      %p395 = por %p393, %p394
      %p396 = scmp.ne.s32.totalorder %s388, %s390
      %p397 = scmp.eq.s32.totalorder %s34, 1
      %p398 = por %p396, %p397
      %p399 = scmp.ne.s32.totalorder %s390, %s391
      %p400 = scmp.eq.s32.totalorder %s34, 0
      %p401 = por %p399, %p400
      %p402 = scmp.ne.s32.totalorder %s390, %s391
      %p403 = scmp.eq.s32.totalorder %s35, 1
      %p404 = por %p402, %p403
      %p406 = scmp.ne.s32.totalorder %s391, %s405
      %p407 = scmp.eq.s32.totalorder %s35, 0
      %p408 = por %p406, %p407
      %s410 = sadd.s32 %s409, 1
      %p413 = scmp.eq.s32.totalorder %s29, 1
      %p414 = scmp.ne.s32.totalorder %s409, %s411
      %p415 = scmp.eq.s32.totalorder %s29, 0
      %p416 = por %p414, %p415
      %p417 = scmp.ne.s32.totalorder %s409, %s411
      %p418 = scmp.eq.s32.totalorder %s34, 1
      %p419 = por %p417, %p418
      %p420 = scmp.ne.s32.totalorder %s411, %s412
      %p421 = scmp.eq.s32.totalorder %s34, 0
      %p422 = por %p420, %p421
      %p423 = scmp.ne.s32.totalorder %s411, %s412
      %p424 = scmp.eq.s32.totalorder %s35, 1
      %p425 = por %p423, %p424
      %p427 = scmp.ne.s32.totalorder %s412, %s426
      %p428 = scmp.eq.s32.totalorder %s35, 0
      %p429 = por %p427, %p428
      %s431 = sadd.s32 %s430, 1
      %p434 = scmp.eq.s32.totalorder %s29, 1
      %p435 = scmp.ne.s32.totalorder %s430, %s432
      %p436 = scmp.eq.s32.totalorder %s29, 0
      %p437 = por %p435, %p436
      %p438 = scmp.ne.s32.totalorder %s430, %s432
      %p439 = scmp.eq.s32.totalorder %s34, 1
      %p440 = por %p438, %p439
      %p441 = scmp.ne.s32.totalorder %s432, %s433
      %p442 = scmp.eq.s32.totalorder %s34, 0
      %p443 = por %p441, %p442
      %p444 = scmp.ne.s32.totalorder %s432, %s433
      %p445 = scmp.eq.s32.totalorder %s35, 1
      %p446 = por %p444, %p445
      %p448 = scmp.ne.s32.totalorder %s433, %s447
      %p449 = scmp.eq.s32.totalorder %s35, 0
      %p450 = por %p448, %p449
      %s451 = ssub.s32 %s29, %s36
      %p452 = scmp.eq.s32.totalorder %s451, 0
      %s454 = sadd.s32 %s453, 1
      %s455 = scalar_select %p452, %s453, %s454
      %p458 = pneg %p452
      %p459 = scmp.eq.s32.totalorder %s29, 1
      %p460 = por %p458, %p459
      %p461 = scmp.ne.s32.totalorder %s453, %s456
      %p462 = scmp.eq.s32.totalorder %s29, 0
      %p463 = por %p461, %p462
      %p464 = scmp.ne.s32.totalorder %s453, %s456
      %p465 = scmp.eq.s32.totalorder %s34, 1
      %p466 = por %p464, %p465
      %p467 = scmp.ne.s32.totalorder %s456, %s457
      %p468 = scmp.eq.s32.totalorder %s34, 0
      %p469 = por %p467, %p468
      %p470 = scmp.ne.s32.totalorder %s456, %s457
      %p471 = scmp.eq.s32.totalorder %s35, 1
      %p472 = por %p470, %p471
      %p474 = scmp.ne.s32.totalorder %s457, %s473
      %p475 = scmp.eq.s32.totalorder %s35, 0
      %p476 = por %p474, %p475
      %p477 = scmp.le.s32.totalorder 1, %s29
      %p478 = scmp.lt.s32.totalorder %s29, 3
      %p479 = pnand %p477, %p478
      %p480 = pneg %p479
      // Predicated region
      $region9: #{tpu_custom_call.1} parent=5 // pred_check
        _
      $region10: #{tpu_custom_call.1} parent=5 // pred_check_branch
        %482 = sbr.rel (%p479) target = $region12
      $region11: #{tpu_custom_call.1} parent=5 // pred_region
        %s483 = ssub.s32 %s29, 1
        // Predicated region
        $region13: #{tpu_custom_call.1} parent=11 // pred_check
          %p484 = pneg %p76
        $region14: #{tpu_custom_call.1} parent=11 // pred_check_branch
          %486 = sbr.rel (%p484) target = $region16
        $region15: #{tpu_custom_call.1} parent=11 // pred_region
          _
        $region16: #{tpu_custom_call.1} parent=11 // pred_fallthru
          _
        // Predicated region
        $region17: #{tpu_custom_call.1} parent=11 // pred_check
          %p487 = pneg %p97
        $region18: #{tpu_custom_call.1} parent=11 // pred_check_branch
          %489 = sbr.rel (%p487) target = $region20
        $region19: #{tpu_custom_call.1} parent=11 // pred_region
          _
        $region20: #{tpu_custom_call.1} parent=11 // pred_fallthru
          _
        // Predicated region
        $region21: #{tpu_custom_call.1} parent=11 // pred_check
          %p490 = pneg %p118
        $region22: #{tpu_custom_call.1} parent=11 // pred_check_branch
          %492 = sbr.rel (%p490) target = $region24
        $region23: #{tpu_custom_call.1} parent=11 // pred_region
          _
        $region24: #{tpu_custom_call.1} parent=11 // pred_fallthru
          _
        // Predicated region
        $region25: #{tpu_custom_call.1} parent=11 // pred_check
          %p493 = pneg %p139
        $region26: #{tpu_custom_call.1} parent=11 // pred_check_branch
          %495 = sbr.rel (%p493) target = $region28
        $region27: #{tpu_custom_call.1} parent=11 // pred_region
          _
        $region28: #{tpu_custom_call.1} parent=11 // pred_fallthru
          _
        // Predicated region
        $region29: #{tpu_custom_call.1} parent=11 // pred_check
          %p496 = pneg %p186
        $region30: #{tpu_custom_call.1} parent=11 // pred_check_branch
          %498 = sbr.rel (%p496) target = $region32
        $region31: #{tpu_custom_call.1} parent=11 // pred_region
          _
        $region32: #{tpu_custom_call.1} parent=11 // pred_fallthru
          _
        // Predicated region
        $region33: #{tpu_custom_call.1} parent=11 // pred_check
          %p499 = pneg %p207
        $region34: #{tpu_custom_call.1} parent=11 // pred_check_branch
          %501 = sbr.rel (%p499) target = $region36
        $region35: #{tpu_custom_call.1} parent=11 // pred_region
          _
        $region36: #{tpu_custom_call.1} parent=11 // pred_fallthru
          _
        // Predicated region
        $region37: #{tpu_custom_call.1} parent=11 // pred_check
          %p502 = pneg %p228
        $region38: #{tpu_custom_call.1} parent=11 // pred_check_branch
          %504 = sbr.rel (%p502) target = $region40
        $region39: #{tpu_custom_call.1} parent=11 // pred_region
          _
        $region40: #{tpu_custom_call.1} parent=11 // pred_fallthru
          _
        // Predicated region
        $region41: #{tpu_custom_call.1} parent=11 // pred_check
          %p505 = pneg %p249
        $region42: #{tpu_custom_call.1} parent=11 // pred_check_branch
          %507 = sbr.rel (%p505) target = $region44
        $region43: #{tpu_custom_call.1} parent=11 // pred_region
          _
        $region44: #{tpu_custom_call.1} parent=11 // pred_fallthru
          _
        // Predicated region
        $region45: #{tpu_custom_call.1} parent=11 // pred_check
          %p508 = pneg %p296
        $region46: #{tpu_custom_call.1} parent=11 // pred_check_branch
          %510 = sbr.rel (%p508) target = $region48
        $region47: #{tpu_custom_call.1} parent=11 // pred_region
          _
        $region48: #{tpu_custom_call.1} parent=11 // pred_fallthru
          _
        // Predicated region
        $region49: #{tpu_custom_call.1} parent=11 // pred_check
          %p511 = pneg %p317
        $region50: #{tpu_custom_call.1} parent=11 // pred_check_branch
          %513 = sbr.rel (%p511) target = $region52
        $region51: #{tpu_custom_call.1} parent=11 // pred_region
          %s515 = ssub.s32 2048, 2048
          %516 = vsyncadd [#allocation3], %s515
          %s517 = sshll.u32 [#allocation2], 4
          %s518 = int_to_ptr.vmem [resolvable:$true] %s517
          %523 = dma.hbm_to_vmem [thread:$0]  %s12, 2048, %s518, [#allocation3], 256, 256, 16
        $region52: #{tpu_custom_call.1} parent=11 // pred_fallthru
          _
        // Predicated region
        $region53: #{tpu_custom_call.1} parent=11 // pred_check
          %p524 = pneg %p338
        $region54: #{tpu_custom_call.1} parent=11 // pred_check_branch
          %526 = sbr.rel (%p524) target = $region56
        $region55: #{tpu_custom_call.1} parent=11 // pred_region
          _
        $region56: #{tpu_custom_call.1} parent=11 // pred_fallthru
          _
        // Predicated region
        $region57: #{tpu_custom_call.1} parent=11 // pred_check
          %p527 = pneg %p359
        $region58: #{tpu_custom_call.1} parent=11 // pred_check_branch
          %529 = sbr.rel (%p527) target = $region60
        $region59: #{tpu_custom_call.1} parent=11 // pred_region
          _
        $region60: #{tpu_custom_call.1} parent=11 // pred_fallthru
          _
        // Predicated region
        $region61: #{tpu_custom_call.1} parent=11 // pred_check
          %p530 = pneg %p380
        $region62: #{tpu_custom_call.1} parent=11 // pred_check_branch
          %532 = sbr.rel (%p530) target = $region64
        $region63: #{tpu_custom_call.1} parent=11 // pred_region
          _
        $region64: #{tpu_custom_call.1} parent=11 // pred_fallthru
          _
        // Predicated region
        $region65: #{tpu_custom_call.1} parent=11 // pred_check
          %p533 = pneg %p401
        $region66: #{tpu_custom_call.1} parent=11 // pred_check_branch
          %535 = sbr.rel (%p533) target = $region68
        $region67: #{tpu_custom_call.1} parent=11 // pred_region
          _
        $region68: #{tpu_custom_call.1} parent=11 // pred_fallthru
          _
        // Predicated region
        $region69: #{tpu_custom_call.1} parent=11 // pred_check
          %p536 = pneg %p422
        $region70: #{tpu_custom_call.1} parent=11 // pred_check_branch
          %538 = sbr.rel (%p536) target = $region72
        $region71: #{tpu_custom_call.1} parent=11 // pred_region
          _
        $region72: #{tpu_custom_call.1} parent=11 // pred_fallthru
          _
        // Predicated region
        $region73: #{tpu_custom_call.1} parent=11 // pred_check
          %p539 = pneg %p443
        $region74: #{tpu_custom_call.1} parent=11 // pred_check_branch
          %541 = sbr.rel (%p539) target = $region76
        $region75: #{tpu_custom_call.1} parent=11 // pred_region
          _
        $region76: #{tpu_custom_call.1} parent=11 // pred_fallthru
          _
      $region12: #{tpu_custom_call.1} parent=5 // pred_fallthru
        _
      %p542 = scmp.lt.s32.totalorder %s29, 2
      // Predicated region
      $region77: #{tpu_custom_call.1} parent=5 // pred_check
        %p543 = pneg %p542
      $region78: #{tpu_custom_call.1} parent=5 // pred_check_branch
        %545 = sbr.rel (%p543) target = $region80
      $region79: #{tpu_custom_call.1} parent=5 // pred_region
        // Predicated region
        $region81: #{tpu_custom_call.1} parent=79 // pred_check
          %p546 = pneg %p49
        $region82: #{tpu_custom_call.1} parent=79 // pred_check_branch
          %548 = sbr.rel (%p546) target = $region84
        $region83: #{tpu_custom_call.1} parent=79 // pred_region
          %p549 = scmp.lt.s32.totalorder %s29, 1
          %s550 = scalar_select %p549, %s29, 1
          %s551 = smul.addr %s550, 2
          %s552 = smul.addr %s551, 8
          %s553 = scalar_lea.vmem %s0, %s552
        $region84: #{tpu_custom_call.1} parent=79 // pred_fallthru
          _
        // Predicated region
        $region85: #{tpu_custom_call.1} parent=79 // pred_check
          %p554 = pneg %p159
        $region86: #{tpu_custom_call.1} parent=79 // pred_check_branch
          %556 = sbr.rel (%p554) target = $region88
        $region87: #{tpu_custom_call.1} parent=79 // pred_region
          %p557 = scmp.lt.s32.totalorder %s29, 1
          %s558 = scalar_select %p557, %s29, 1
          %s559 = smul.addr %s558, 8
          %s560 = scalar_lea.vmem %s5, %s559
        $region88: #{tpu_custom_call.1} parent=79 // pred_fallthru
          _
        // Predicated region
        $region89: #{tpu_custom_call.1} parent=79 // pred_check
          %p561 = pneg %p269
        $region90: #{tpu_custom_call.1} parent=79 // pred_check_branch
          %563 = sbr.rel (%p561) target = $region92
        $region91: #{tpu_custom_call.1} parent=79 // pred_region
          %p564 = scmp.lt.s32.totalorder %s29, 1
          %s565 = scalar_select %p564, %s29, 1
          %s566 = smul.addr %s565, 4
          %s567 = scalar_lea.vmem %s10, %s566
        $region92: #{tpu_custom_call.1} parent=79 // pred_fallthru
          _
      $region80: #{tpu_custom_call.1} parent=5 // pred_fallthru
        _
      %p568 = scmp.le.s32.totalorder 1, %s29
      %p569 = scmp.lt.s32.totalorder %s29, 3
      %p570 = pnand %p568, %p569
      %p571 = pneg %p570
      // Predicated region
      $region93: #{tpu_custom_call.1} parent=5 // pred_check
        _
      $region94: #{tpu_custom_call.1} parent=5 // pred_check_branch
        %573 = sbr.rel (%p570) target = $region96
      $region95: #{tpu_custom_call.1} parent=5 // pred_region
        %s574 = ssub.s32 %s29, 1
        // Predicated region
        $region97: #{tpu_custom_call.1} parent=95 // pred_check
          %p575 = pneg %p317
        $region98: #{tpu_custom_call.1} parent=95 // pred_check_branch
          %577 = sbr.rel (%p575) target = $region100
        $region99: #{tpu_custom_call.1} parent=95 // pred_region
          %578 = dma.done [#allocation3], 2048
        $region100: #{tpu_custom_call.1} parent=95 // pred_fallthru
          _
        %p579 = scmp.lt.s32.totalorder %s34, 1
        %s580 = scalar_select %p579, %s34, 1
        %s581 = smul.addr %s580, 2
        %s582 = smul.addr %s581, 8
        %s583 = scalar_lea.vmem %s0, %s582
        %p584 = pneg %p55
        %p585 = pneg %p52
        %p586 = pneg %p76
        %p587 = pneg %p73
        %p588 = pneg %p97
        %p589 = pneg %p94
        %p590 = pneg %p118
        %p591 = pneg %p115
        %p592 = pneg %p139
        %p593 = pneg %p136
        %p594 = scmp.lt.s32.totalorder %s34, 1
        %s595 = scalar_select %p594, %s34, 1
        %s596 = smul.addr %s595, 8
        %s597 = scalar_lea.vmem %s5, %s596
        %p598 = pneg %p165
        %p599 = pneg %p162
        %p600 = pneg %p186
        %p601 = pneg %p183
        %p602 = pneg %p207
        %p603 = pneg %p204
        %p604 = pneg %p228
        %p605 = pneg %p225
        %p606 = pneg %p249
        %p607 = pneg %p246
        %p608 = scmp.lt.s32.totalorder %s34, 1
        %s609 = scalar_select %p608, %s34, 1
        %s610 = smul.addr %s609, 4
        %s611 = scalar_lea.vmem %s10, %s610
        %p612 = pneg %p275
        %p613 = pneg %p272
        %p614 = pneg %p296
        %p615 = pneg %p293
        %p616 = pneg %p317
        %p617 = pneg %p314
        %p618 = pneg %p338
        %p619 = pneg %p335
        %p620 = pneg %p359
        %p621 = pneg %p356
        %p622 = pneg %p380
        %p623 = pneg %p377
        %p624 = pneg %p401
        %p625 = pneg %p398
        %p626 = pneg %p422
        %p627 = pneg %p419
        %p628 = pneg %p443
        %p629 = pneg %p440
        %p630 = pneg %p469
        %p631 = pneg %p466
        %s632 = sand.u32 %s456, 1
        %s633 = scalar_lea.sflag [#allocation4], %s632
        %s634 = sand.u32 %s456, 1
        %s635 = smul.addr %s634, 8
        %s636 = scalar_lea.vmem [#allocation5], %s635
        %p637 = scmp.lt.s32.totalorder %s34, 1
        %s638 = scalar_select %p637, %s34, 1
        %s639 = smul.addr %s638, 2
        %s640 = smul.addr %s639, 8
        %s641 = scalar_lea.vmem %s0, %s640
        %p642 = scmp.lt.s32.totalorder %s34, 1
        %s643 = scalar_select %p642, %s34, 1
        %s644 = smul.addr %s643, 8
        %s645 = scalar_lea.vmem %s5, %s644
        %p646 = scmp.lt.s32.totalorder %s34, 1
        %s647 = scalar_select %p646, %s34, 1
        %s648 = smul.addr %s647, 4
        %s649 = scalar_lea.vmem %s10, %s648
        %v650 = vld [vmem:[%s1] sm:$0xff]
        %v651 = vld [vmem:[%s641] sm:$0xff]
        %v652 = vld [vmem:[%s641 + $0x8] sm:$0xff]
        %vm653 = vcmask 130048
        %v655 = vsel %vm653, %v650, 0
        %657 = vmatprep.subr.mxu0 0.0
        %658 = vmatpush1.msra.mxu0 0.0
        %659 = vmatprep.subr.mxu0 0.0
        %660 = vmatpush1.msra.mxu0 0.0
        %661 = vmatprep.subr.mxu0 0.0
        %662 = vmatpush1.msra.mxu0 0.0
        %663 = vmatprep.subr.mxu0 0.0
        %664 = vmatpush1.msra.mxu0 0.0
        %665 = vmatprep.subr.mxu0 0.0
        %666 = vmatpush1.msra.mxu0 0.0
        %667 = vmatprep.subr.mxu0 0.0
        %668 = vmatpush1.msra.mxu0 0.0
        %669 = vmatprep.subr.mxu0 0.0
        %670 = vmatpush1.msra.mxu0 0.0
        %671 = vmatprep.subr.mxu0 0.0
        %672 = vmatpush1.msra.mxu0 0.0
        %673 = vmatprep.subr.mxu0 0.0
        %674 = vmatpush1.msra.mxu0 0.0
        %675 = vmatprep.subr.mxu0 0.0
        %676 = vmatpush1.msra.mxu0 0.0
        %677 = vmatprep.subr.mxu0 0.0
        %678 = vmatpush1.msra.mxu0 0.0
        %679 = vmatprep.subr.mxu0 0.0
        %680 = vmatpush1.msra.mxu0 0.0
        %681 = vmatprep.subr.mxu0 0.0
        %682 = vmatpush1.msra.mxu0 0.0
        %683 = vmatprep.subr.mxu0 0.0
        %684 = vmatpush1.msra.mxu0 0.0
        %685 = vmatprep.subr.mxu0 0.0
        %686 = vmatpush1.msra.mxu0 %v652
        %687 = vmatprep.subr.mxu0 0.0
        %688 = vmatpush1.msra.mxu0 %v651
        %689 = vmatprep.subr.mxu0 0.0
        %690 = vmatpush2.msra.mxu0 0.0
        %691 = vmatprep.subr.mxu0 0.0
        %692 = vmatpush2.msra.mxu0 0.0
        %693 = vmatprep.subr.mxu0 0.0
        %694 = vmatpush2.msra.mxu0 0.0
        %695 = vmatprep.subr.mxu0 0.0
        %696 = vmatpush2.msra.mxu0 0.0
        %697 = vmatprep.subr.mxu0 0.0
        %698 = vmatpush2.msra.mxu0 0.0
        %699 = vmatprep.subr.mxu0 0.0
        %700 = vmatpush2.msra.mxu0 0.0
        %701 = vmatprep.subr.mxu0 0.0
        %702 = vmatpush2.msra.mxu0 0.0
        %703 = vmatprep.subr.mxu0 0.0
        %704 = vmatpush2.msra.mxu0 0.0
        %705 = vmatprep.subr.mxu0 0.0
        %706 = vmatpush2.msra.mxu0 0.0
        %707 = vmatprep.subr.mxu0 0.0
        %708 = vmatpush2.msra.mxu0 0.0
        %709 = vmatprep.subr.mxu0 0.0
        %710 = vmatpush2.msra.mxu0 0.0
        %711 = vmatprep.subr.mxu0 0.0
        %712 = vmatpush2.msra.mxu0 0.0
        %713 = vmatprep.subr.mxu0 0.0
        %714 = vmatpush2.msra.mxu0 0.0
        %715 = vmatprep.subr.mxu0 0.0
        %716 = vmatpush2.msra.mxu0 0.0
        %717 = vmatprep.subr.mxu0 0.0
        %718 = vmatpush2.msra.mxu0 0.0
        %719 = vmatprep.subr.mxu0 0.0
        %720 = vmatpush2.msra.mxu0 0.0
        %721 = vmatprep.mubr.f32.mxu0 0.0
        %722 = vmatmul.mubr.f32.gmra.mxu0 %v655
        %v723 = vpop.f32.mrf.mxu0
        %v724 = vadd.f32 0.0, %v723
        %v725 = vpop.f32.mrf.mxu0
        %726 = vdwg.mxu0
        %v727 = vld [vmem:[%s2] sm:$0xff]
        %v728 = vld [vmem:[%s3] sm:$0xff]
        %730 = vset.pattern.permute.xlu0 0
        %731 = vperm.xlu0 %730, %v728
        %v732 = vpop.permute.xlu0 %731
        %v735 = vcombine.high %v727, %v727
        %vm736 = vcmask 31744
        %v738 = vsel %vm736, %v724, 0
        %vm740 = vcmask 1043456
        %v741 = vsel %vm740, %v727, 0
        %v743 = vsel %vm740, %v735, 0
        %745 = vmatprep.subr.mxu0 0.0
        %746 = vmatpush1.msra.mxu0 0.0
        %747 = vmatprep.subr.mxu0 0.0
        %748 = vmatpush1.msra.mxu0 0.0
        %749 = vmatprep.subr.mxu0 0.0
        %750 = vmatpush1.msra.mxu0 0.0
        %751 = vmatprep.subr.mxu0 0.0
        %752 = vmatpush1.msra.mxu0 0.0
        %753 = vmatprep.subr.mxu0 0.0
        %754 = vmatpush1.msra.mxu0 0.0
        %755 = vmatprep.subr.mxu0 0.0
        %756 = vmatpush1.msra.mxu0 0.0
        %757 = vmatprep.subr.mxu0 0.0
        %758 = vmatpush1.msra.mxu0 0.0
        %759 = vmatprep.subr.mxu0 0.0
        %760 = vmatpush1.msra.mxu0 0.0
        %761 = vmatprep.subr.mxu0 0.0
        %762 = vmatpush1.msra.mxu0 0.0
        %763 = vmatprep.subr.mxu0 0.0
        %764 = vmatpush1.msra.mxu0 0.0
        %765 = vmatprep.subr.mxu0 0.0
        %766 = vmatpush1.msra.mxu0 0.0
        %767 = vmatprep.subr.mxu0 0.0
        %768 = vmatpush1.msra.mxu0 0.0
        %769 = vmatprep.subr.mxu0 0.0
        %770 = vmatpush1.msra.mxu0 0.0
        %771 = vmatprep.subr.mxu0 0.0
        %772 = vmatpush1.msra.mxu0 0.0
        %773 = vmatprep.subr.mxu0 0.0
        %774 = vmatpush1.msra.mxu0 0.0
        %775 = vmatprep.subr.mxu0 %v743
        %776 = vmatpush1.msra.mxu0 %v741
        %777 = vmatprep.subr.mxu0 0.0
        %778 = vmatpush2.msra.mxu0 0.0
        %779 = vmatprep.subr.mxu0 0.0
        %780 = vmatpush2.msra.mxu0 0.0
        %781 = vmatprep.subr.mxu0 0.0
        %782 = vmatpush2.msra.mxu0 0.0
        %783 = vmatprep.subr.mxu0 0.0
        %784 = vmatpush2.msra.mxu0 0.0
        %785 = vmatprep.subr.mxu0 0.0
        %786 = vmatpush2.msra.mxu0 0.0
        %787 = vmatprep.subr.mxu0 0.0
        %788 = vmatpush2.msra.mxu0 0.0
        %789 = vmatprep.subr.mxu0 0.0
        %790 = vmatpush2.msra.mxu0 0.0
        %791 = vmatprep.subr.mxu0 0.0
        %792 = vmatpush2.msra.mxu0 0.0
        %793 = vmatprep.subr.mxu0 0.0
        %794 = vmatpush2.msra.mxu0 0.0
        %795 = vmatprep.subr.mxu0 0.0
        %796 = vmatpush2.msra.mxu0 0.0
        %797 = vmatprep.subr.mxu0 0.0
        %798 = vmatpush2.msra.mxu0 0.0
        %799 = vmatprep.subr.mxu0 0.0
        %800 = vmatpush2.msra.mxu0 0.0
        %801 = vmatprep.subr.mxu0 0.0
        %802 = vmatpush2.msra.mxu0 0.0
        %803 = vmatprep.subr.mxu0 0.0
        %804 = vmatpush2.msra.mxu0 0.0
        %805 = vmatprep.subr.mxu0 0.0
        %806 = vmatpush2.msra.mxu0 0.0
        %807 = vmatprep.subr.mxu0 0.0
        %808 = vmatpush2.msra.mxu0 0.0
        %809 = vmatprep.mubr.f32.mxu0 0.0
        %810 = vmatmul.mubr.f32.gmra.mxu0 %v738
        %v811 = vpop.f32.mrf.mxu0
        %v812 = vadd.f32 %v732, %v811
        %v813 = vpop.f32.mrf.mxu0
        %v814 = vadd.f32 %v732, %v813
        %815 = vdwg.mxu0
        %v816 = vld [vmem:[%s4] sm:$0xff]
        %v817 = vld [vmem:[%s6] sm:$0xff]
        %v818 = vld [vmem:[%s645] sm:$0xff]
        %vm819 = vcmask 64512
        %v821 = vsel %vm819, %v817, 0
        %823 = vmatprep.subr.mxu0 0.0
        %824 = vmatpush1.msra.mxu0 0.0
        %825 = vmatprep.subr.mxu0 0.0
        %826 = vmatpush1.msra.mxu0 0.0
        %827 = vmatprep.subr.mxu0 0.0
        %828 = vmatpush1.msra.mxu0 0.0
        %829 = vmatprep.subr.mxu0 0.0
        %830 = vmatpush1.msra.mxu0 0.0
        %831 = vmatprep.subr.mxu0 0.0
        %832 = vmatpush1.msra.mxu0 0.0
        %833 = vmatprep.subr.mxu0 0.0
        %834 = vmatpush1.msra.mxu0 0.0
        %835 = vmatprep.subr.mxu0 0.0
        %836 = vmatpush1.msra.mxu0 0.0
        %837 = vmatprep.subr.mxu0 0.0
        %838 = vmatpush1.msra.mxu0 0.0
        %839 = vmatprep.subr.mxu0 0.0
        %840 = vmatpush1.msra.mxu0 0.0
        %841 = vmatprep.subr.mxu0 0.0
        %842 = vmatpush1.msra.mxu0 0.0
        %843 = vmatprep.subr.mxu0 0.0
        %844 = vmatpush1.msra.mxu0 0.0
        %845 = vmatprep.subr.mxu0 0.0
        %846 = vmatpush1.msra.mxu0 0.0
        %847 = vmatprep.subr.mxu0 0.0
        %848 = vmatpush1.msra.mxu0 0.0
        %849 = vmatprep.subr.mxu0 0.0
        %850 = vmatpush1.msra.mxu0 0.0
        %851 = vmatprep.subr.mxu0 0.0
        %852 = vmatpush1.msra.mxu0 0.0
        %853 = vmatprep.subr.mxu0 0.0
        %854 = vmatpush1.msra.mxu0 %v818
        %855 = vmatprep.subr.mxu0 0.0
        %856 = vmatpush2.msra.mxu0 0.0
        %857 = vmatprep.subr.mxu0 0.0
        %858 = vmatpush2.msra.mxu0 0.0
        %859 = vmatprep.subr.mxu0 0.0
        %860 = vmatpush2.msra.mxu0 0.0
        %861 = vmatprep.subr.mxu0 0.0
        %862 = vmatpush2.msra.mxu0 0.0
        %863 = vmatprep.subr.mxu0 0.0
        %864 = vmatpush2.msra.mxu0 0.0
        %865 = vmatprep.subr.mxu0 0.0
        %866 = vmatpush2.msra.mxu0 0.0
        %867 = vmatprep.subr.mxu0 0.0
        %868 = vmatpush2.msra.mxu0 0.0
        %869 = vmatprep.subr.mxu0 0.0
        %870 = vmatpush2.msra.mxu0 0.0
        %871 = vmatprep.subr.mxu0 0.0
        %872 = vmatpush2.msra.mxu0 0.0
        %873 = vmatprep.subr.mxu0 0.0
        %874 = vmatpush2.msra.mxu0 0.0
        %875 = vmatprep.subr.mxu0 0.0
        %876 = vmatpush2.msra.mxu0 0.0
        %877 = vmatprep.subr.mxu0 0.0
        %878 = vmatpush2.msra.mxu0 0.0
        %879 = vmatprep.subr.mxu0 0.0
        %880 = vmatpush2.msra.mxu0 0.0
        %881 = vmatprep.subr.mxu0 0.0
        %882 = vmatpush2.msra.mxu0 0.0
        %883 = vmatprep.subr.mxu0 0.0
        %884 = vmatpush2.msra.mxu0 0.0
        %885 = vmatprep.subr.mxu0 0.0
        %886 = vmatpush2.msra.mxu0 0.0
        %887 = vmatprep.mubr.f32.mxu0 0.0
        %888 = vmatmul.mubr.f32.gmra.mxu0 %v821
        %v889 = vpop.f32.mrf.mxu0
        %v890 = vadd.f32 0.0, %v889
        %v891 = vpop.f32.mrf.mxu0
        %892 = vdwg.mxu0
        %v893 = vld [vmem:[%s7] sm:$0xff]
        %v894 = vld [vmem:[%s7 + $0x8] sm:$0xff]
        %v895 = vld [vmem:[%s7 + $0x10] sm:$0xff]
        %v896 = vld [vmem:[%s7 + $0x18] sm:$0xff]
        %v897 = vld [vmem:[%s8] sm:$0xff]
        %899 = vset.pattern.permute.xlu0 0
        %900 = vperm.xlu0 %899, %v897
        %v901 = vpop.permute.xlu0 %900
        %v904 = vsel %vm653, %v890, 0
        %906 = vmatprep.subr.mxu0 0.0
        %907 = vmatpush1.msra.mxu0 0.0
        %908 = vmatprep.subr.mxu0 0.0
        %909 = vmatpush1.msra.mxu0 0.0
        %910 = vmatprep.subr.mxu0 0.0
        %911 = vmatpush1.msra.mxu0 0.0
        %912 = vmatprep.subr.mxu0 0.0
        %913 = vmatpush1.msra.mxu0 0.0
        %914 = vmatprep.subr.mxu0 0.0
        %915 = vmatpush1.msra.mxu0 0.0
        %916 = vmatprep.subr.mxu0 0.0
        %917 = vmatpush1.msra.mxu0 0.0
        %918 = vmatprep.subr.mxu0 0.0
        %919 = vmatpush1.msra.mxu0 0.0
        %920 = vmatprep.subr.mxu0 0.0
        %921 = vmatpush1.msra.mxu0 0.0
        %922 = vmatprep.subr.mxu0 0.0
        %923 = vmatpush1.msra.mxu0 0.0
        %924 = vmatprep.subr.mxu0 0.0
        %925 = vmatpush1.msra.mxu0 0.0
        %926 = vmatprep.subr.mxu0 0.0
        %927 = vmatpush1.msra.mxu0 0.0
        %928 = vmatprep.subr.mxu0 0.0
        %929 = vmatpush1.msra.mxu0 0.0
        %930 = vmatprep.subr.mxu0 0.0
        %931 = vmatpush1.msra.mxu0 0.0
        %932 = vmatprep.subr.mxu0 0.0
        %933 = vmatpush1.msra.mxu0 0.0
        %934 = vmatprep.subr.mxu0 %v896
        %935 = vmatpush1.msra.mxu0 %v895
        %936 = vmatprep.subr.mxu0 %v894
        %937 = vmatpush1.msra.mxu0 %v893
        %938 = vmatprep.subr.mxu0 0.0
        %939 = vmatpush2.msra.mxu0 0.0
        %940 = vmatprep.subr.mxu0 0.0
        %941 = vmatpush2.msra.mxu0 0.0
        %942 = vmatprep.subr.mxu0 0.0
        %943 = vmatpush2.msra.mxu0 0.0
        %944 = vmatprep.subr.mxu0 0.0
        %945 = vmatpush2.msra.mxu0 0.0
        %946 = vmatprep.subr.mxu0 0.0
        %947 = vmatpush2.msra.mxu0 0.0
        %948 = vmatprep.subr.mxu0 0.0
        %949 = vmatpush2.msra.mxu0 0.0
        %950 = vmatprep.subr.mxu0 0.0
        %951 = vmatpush2.msra.mxu0 0.0
        %952 = vmatprep.subr.mxu0 0.0
        %953 = vmatpush2.msra.mxu0 0.0
        %954 = vmatprep.subr.mxu0 0.0
        %955 = vmatpush2.msra.mxu0 0.0
        %956 = vmatprep.subr.mxu0 0.0
        %957 = vmatpush2.msra.mxu0 0.0
        %958 = vmatprep.subr.mxu0 0.0
        %959 = vmatpush2.msra.mxu0 0.0
        %960 = vmatprep.subr.mxu0 0.0
        %961 = vmatpush2.msra.mxu0 0.0
        %962 = vmatprep.subr.mxu0 0.0
        %963 = vmatpush2.msra.mxu0 0.0
        %964 = vmatprep.subr.mxu0 0.0
        %965 = vmatpush2.msra.mxu0 0.0
        %966 = vmatprep.subr.mxu0 0.0
        %967 = vmatpush2.msra.mxu0 0.0
        %968 = vmatprep.subr.mxu0 0.0
        %969 = vmatpush2.msra.mxu0 0.0
        %970 = vmatprep.mubr.f32.mxu0 0.0
        %971 = vmatmul.mubr.f32.gmra.mxu0 %v904
        %v972 = vpop.f32.mrf.mxu0
        %v973 = vadd.f32 %v901, %v972
        %v974 = vpop.f32.mrf.mxu0
        %v975 = vadd.f32 %v901, %v974
        %976 = vdwg.mxu0
        %v977 = vld [vmem:[%s9] sm:$0xff]
        %v979 = vsel %vm819, %v977, 0
        %981 = vmatprep.subr.mxu0 0.0
        %982 = vmatpush1.msra.mxu0 0.0
        %983 = vmatprep.subr.mxu0 0.0
        %984 = vmatpush1.msra.mxu0 0.0
        %985 = vmatprep.subr.mxu0 0.0
        %986 = vmatpush1.msra.mxu0 0.0
        %987 = vmatprep.subr.mxu0 0.0
        %988 = vmatpush1.msra.mxu0 0.0
        %989 = vmatprep.subr.mxu0 0.0
        %990 = vmatpush1.msra.mxu0 0.0
        %991 = vmatprep.subr.mxu0 0.0
        %992 = vmatpush1.msra.mxu0 0.0
        %993 = vmatprep.subr.mxu0 0.0
        %994 = vmatpush1.msra.mxu0 0.0
        %995 = vmatprep.subr.mxu0 0.0
        %996 = vmatpush1.msra.mxu0 0.0
        %997 = vmatprep.subr.mxu0 0.0
        %998 = vmatpush1.msra.mxu0 0.0
        %999 = vmatprep.subr.mxu0 0.0
        %1000 = vmatpush1.msra.mxu0 0.0
        %1001 = vmatprep.subr.mxu0 0.0
        %1002 = vmatpush1.msra.mxu0 0.0
        %1003 = vmatprep.subr.mxu0 0.0
        %1004 = vmatpush1.msra.mxu0 0.0
        %1005 = vmatprep.subr.mxu0 0.0
        %1006 = vmatpush1.msra.mxu0 0.0
        %1007 = vmatprep.subr.mxu0 0.0
        %1008 = vmatpush1.msra.mxu0 0.0
        %1009 = vmatprep.subr.mxu0 0.0
        %1010 = vmatpush1.msra.mxu0 0.0
        %1011 = vmatprep.subr.mxu0 %v975
        %1012 = vmatpush1.msra.mxu0 %v973
        %1013 = vmatprep.subr.mxu0 0.0
        %1014 = vmatpush2.msra.mxu0 0.0
        %1015 = vmatprep.subr.mxu0 0.0
        %1016 = vmatpush2.msra.mxu0 0.0
        %1017 = vmatprep.subr.mxu0 0.0
        %1018 = vmatpush2.msra.mxu0 0.0
        %1019 = vmatprep.subr.mxu0 0.0
        %1020 = vmatpush2.msra.mxu0 0.0
        %1021 = vmatprep.subr.mxu0 0.0
        %1022 = vmatpush2.msra.mxu0 0.0
        %1023 = vmatprep.subr.mxu0 0.0
        %1024 = vmatpush2.msra.mxu0 0.0
        %1025 = vmatprep.subr.mxu0 0.0
        %1026 = vmatpush2.msra.mxu0 0.0
        %1027 = vmatprep.subr.mxu0 0.0
        %1028 = vmatpush2.msra.mxu0 0.0
        %1029 = vmatprep.subr.mxu0 0.0
        %1030 = vmatpush2.msra.mxu0 0.0
        %1031 = vmatprep.subr.mxu0 0.0
        %1032 = vmatpush2.msra.mxu0 0.0
        %1033 = vmatprep.subr.mxu0 0.0
        %1034 = vmatpush2.msra.mxu0 0.0
        %1035 = vmatprep.subr.mxu0 0.0
        %1036 = vmatpush2.msra.mxu0 0.0
        %1037 = vmatprep.subr.mxu0 0.0
        %1038 = vmatpush2.msra.mxu0 0.0
        %1039 = vmatprep.subr.mxu0 0.0
        %1040 = vmatpush2.msra.mxu0 0.0
        %1041 = vmatprep.subr.mxu0 0.0
        %1042 = vmatpush2.msra.mxu0 0.0
        %1043 = vmatprep.subr.mxu0 0.0
        %1044 = vmatpush2.msra.mxu0 0.0
        %1045 = vmatprep.mubr.f32.mxu0 0.0
        %1046 = vmatmul.mubr.f32.gmra.mxu0 %v979
        %v1047 = vpop.f32.mrf.mxu0
        %v1048 = vadd.f32 0.0, %v1047
        %v1049 = vpop.f32.mrf.mxu0
        %v1050 = vadd.f32 0.0, %v1049
        %1051 = vdwg.mxu0
        %v1053 = vsel %vm819, %v816, 0
        %1055 = vmatprep.subr.mxu0 0.0
        %1056 = vmatpush1.msra.mxu0 0.0
        %1057 = vmatprep.subr.mxu0 0.0
        %1058 = vmatpush1.msra.mxu0 0.0
        %1059 = vmatprep.subr.mxu0 0.0
        %1060 = vmatpush1.msra.mxu0 0.0
        %1061 = vmatprep.subr.mxu0 0.0
        %1062 = vmatpush1.msra.mxu0 0.0
        %1063 = vmatprep.subr.mxu0 0.0
        %1064 = vmatpush1.msra.mxu0 0.0
        %1065 = vmatprep.subr.mxu0 0.0
        %1066 = vmatpush1.msra.mxu0 0.0
        %1067 = vmatprep.subr.mxu0 0.0
        %1068 = vmatpush1.msra.mxu0 0.0
        %1069 = vmatprep.subr.mxu0 0.0
        %1070 = vmatpush1.msra.mxu0 0.0
        %1071 = vmatprep.subr.mxu0 0.0
        %1072 = vmatpush1.msra.mxu0 0.0
        %1073 = vmatprep.subr.mxu0 0.0
        %1074 = vmatpush1.msra.mxu0 0.0
        %1075 = vmatprep.subr.mxu0 0.0
        %1076 = vmatpush1.msra.mxu0 0.0
        %1077 = vmatprep.subr.mxu0 0.0
        %1078 = vmatpush1.msra.mxu0 0.0
        %1079 = vmatprep.subr.mxu0 0.0
        %1080 = vmatpush1.msra.mxu0 0.0
        %1081 = vmatprep.subr.mxu0 0.0
        %1082 = vmatpush1.msra.mxu0 0.0
        %1083 = vmatprep.subr.mxu0 0.0
        %1084 = vmatpush1.msra.mxu0 0.0
        %1085 = vmatprep.subr.mxu0 %v814
        %1086 = vmatpush1.msra.mxu0 %v812
        %1087 = vmatprep.subr.mxu0 0.0
        %1088 = vmatpush2.msra.mxu0 0.0
        %1089 = vmatprep.subr.mxu0 0.0
        %1090 = vmatpush2.msra.mxu0 0.0
        %1091 = vmatprep.subr.mxu0 0.0
        %1092 = vmatpush2.msra.mxu0 0.0
        %1093 = vmatprep.subr.mxu0 0.0
        %1094 = vmatpush2.msra.mxu0 0.0
        %1095 = vmatprep.subr.mxu0 0.0
        %1096 = vmatpush2.msra.mxu0 0.0
        %1097 = vmatprep.subr.mxu0 0.0
        %1098 = vmatpush2.msra.mxu0 0.0
        %1099 = vmatprep.subr.mxu0 0.0
        %1100 = vmatpush2.msra.mxu0 0.0
        %1101 = vmatprep.subr.mxu0 0.0
        %1102 = vmatpush2.msra.mxu0 0.0
        %1103 = vmatprep.subr.mxu0 0.0
        %1104 = vmatpush2.msra.mxu0 0.0
        %1105 = vmatprep.subr.mxu0 0.0
        %1106 = vmatpush2.msra.mxu0 0.0
        %1107 = vmatprep.subr.mxu0 0.0
        %1108 = vmatpush2.msra.mxu0 0.0
        %1109 = vmatprep.subr.mxu0 0.0
        %1110 = vmatpush2.msra.mxu0 0.0
        %1111 = vmatprep.subr.mxu0 0.0
        %1112 = vmatpush2.msra.mxu0 0.0
        %1113 = vmatprep.subr.mxu0 0.0
        %1114 = vmatpush2.msra.mxu0 0.0
        %1115 = vmatprep.subr.mxu0 0.0
        %1116 = vmatpush2.msra.mxu0 0.0
        %1117 = vmatprep.subr.mxu0 0.0
        %1118 = vmatpush2.msra.mxu0 0.0
        %1119 = vmatprep.mubr.f32.mxu0 0.0
        %1120 = vmatmul.mubr.f32.gmra.mxu0 %v1053
        %v1121 = vpop.f32.mrf.mxu0
        %v1122 = vadd.f32 %v1048, %v1121
        %v1123 = vpop.f32.mrf.mxu0
        %v1124 = vadd.f32 %v1050, %v1123
        %1125 = vdwg.mxu0
        %v1126 = vld [vmem:[%s11] sm:$0xff]
        %v1127 = vld [vmem:[%s649] sm:$0xf]
        %v1129 = vsel %vm736, %v1126, 0
        %v1132 = vsel %vm740, %v1127, 0
        %1134 = vmatprep.subr.mxu0 0.0
        %1135 = vmatpush1.msra.mxu0 0.0
        %1136 = vmatprep.subr.mxu0 0.0
        %1137 = vmatpush1.msra.mxu0 0.0
        %1138 = vmatprep.subr.mxu0 0.0
        %1139 = vmatpush1.msra.mxu0 0.0
        %1140 = vmatprep.subr.mxu0 0.0
        %1141 = vmatpush1.msra.mxu0 0.0
        %1142 = vmatprep.subr.mxu0 0.0
        %1143 = vmatpush1.msra.mxu0 0.0
        %1144 = vmatprep.subr.mxu0 0.0
        %1145 = vmatpush1.msra.mxu0 0.0
        %1146 = vmatprep.subr.mxu0 0.0
        %1147 = vmatpush1.msra.mxu0 0.0
        %1148 = vmatprep.subr.mxu0 0.0
        %1149 = vmatpush1.msra.mxu0 0.0
        %1150 = vmatprep.subr.mxu0 0.0
        %1151 = vmatpush1.msra.mxu0 0.0
        %1152 = vmatprep.subr.mxu0 0.0
        %1153 = vmatpush1.msra.mxu0 0.0
        %1154 = vmatprep.subr.mxu0 0.0
        %1155 = vmatpush1.msra.mxu0 0.0
        %1156 = vmatprep.subr.mxu0 0.0
        %1157 = vmatpush1.msra.mxu0 0.0
        %1158 = vmatprep.subr.mxu0 0.0
        %1159 = vmatpush1.msra.mxu0 0.0
        %1160 = vmatprep.subr.mxu0 0.0
        %1161 = vmatpush1.msra.mxu0 0.0
        %1162 = vmatprep.subr.mxu0 0.0
        %1163 = vmatpush1.msra.mxu0 0.0
        %1164 = vmatprep.subr.mxu0 0.0
        %1165 = vmatpush1.msra.mxu0 %v1132
        %1166 = vmatprep.subr.mxu0 0.0
        %1167 = vmatpush2.msra.mxu0 0.0
        %1168 = vmatprep.subr.mxu0 0.0
        %1169 = vmatpush2.msra.mxu0 0.0
        %1170 = vmatprep.subr.mxu0 0.0
        %1171 = vmatpush2.msra.mxu0 0.0
        %1172 = vmatprep.subr.mxu0 0.0
        %1173 = vmatpush2.msra.mxu0 0.0
        %1174 = vmatprep.subr.mxu0 0.0
        %1175 = vmatpush2.msra.mxu0 0.0
        %1176 = vmatprep.subr.mxu0 0.0
        %1177 = vmatpush2.msra.mxu0 0.0
        %1178 = vmatprep.subr.mxu0 0.0
        %1179 = vmatpush2.msra.mxu0 0.0
        %1180 = vmatprep.subr.mxu0 0.0
        %1181 = vmatpush2.msra.mxu0 0.0
        %1182 = vmatprep.subr.mxu0 0.0
        %1183 = vmatpush2.msra.mxu0 0.0
        %1184 = vmatprep.subr.mxu0 0.0
        %1185 = vmatpush2.msra.mxu0 0.0
        %1186 = vmatprep.subr.mxu0 0.0
        %1187 = vmatpush2.msra.mxu0 0.0
        %1188 = vmatprep.subr.mxu0 0.0
        %1189 = vmatpush2.msra.mxu0 0.0
        %1190 = vmatprep.subr.mxu0 0.0
        %1191 = vmatpush2.msra.mxu0 0.0
        %1192 = vmatprep.subr.mxu0 0.0
        %1193 = vmatpush2.msra.mxu0 0.0
        %1194 = vmatprep.subr.mxu0 0.0
        %1195 = vmatpush2.msra.mxu0 0.0
        %1196 = vmatprep.subr.mxu0 0.0
        %1197 = vmatpush2.msra.mxu0 0.0
        %1198 = vmatprep.mubr.f32.mxu0 0.0
        %1199 = vmatmul.mubr.f32.gmra.mxu0 %v1129
        %v1200 = vpop.f32.mrf.mxu0
        %v1201 = vadd.f32 0.0, %v1200
        %v1202 = vpop.f32.mrf.mxu0
        %1203 = vdwg.mxu0
        %v1204 = vld [vmem:[#allocation2] sm:$0xff]
        %v1205 = vld [vmem:[#allocation2 + $0x8] sm:$0xff]
        %v1206 = vld [vmem:[#allocation2 + $0x10] sm:$0xff]
        %v1207 = vld [vmem:[#allocation2 + $0x18] sm:$0xff]
        %v1208 = vld [vmem:[#allocation2 + $0x20] sm:$0xff]
        %v1209 = vld [vmem:[#allocation2 + $0x28] sm:$0xff]
        %v1210 = vld [vmem:[#allocation2 + $0x30] sm:$0xff]
        %v1211 = vld [vmem:[#allocation2 + $0x38] sm:$0xff]
        %v1212 = vld [vmem:[#allocation2 + $0x40] sm:$0xff]
        %v1213 = vld [vmem:[#allocation2 + $0x48] sm:$0xff]
        %v1214 = vld [vmem:[#allocation2 + $0x50] sm:$0xff]
        %v1215 = vld [vmem:[#allocation2 + $0x58] sm:$0xff]
        %v1216 = vld [vmem:[#allocation2 + $0x60] sm:$0xff]
        %v1217 = vld [vmem:[#allocation2 + $0x68] sm:$0xff]
        %v1218 = vld [vmem:[#allocation2 + $0x70] sm:$0xff]
        %v1219 = vld [vmem:[#allocation2 + $0x78] sm:$0xff]
        %v1220 = vld [vmem:[%s13] sm:$0xff]
        %1222 = vset.pattern.permute.xlu0 0
        %1223 = vperm.xlu0 %1222, %v1220
        %v1224 = vpop.permute.xlu0 %1223
        %vm1226 = vcmask 523264
        %v1228 = vsel %vm1226, %v1201, 0
        %1230 = vmatprep.subr.mxu0 0.0
        %1231 = vmatpush1.msra.mxu0 0.0
        %1232 = vmatprep.subr.mxu0 0.0
        %1233 = vmatpush1.msra.mxu0 0.0
        %1234 = vmatprep.subr.mxu0 0.0
        %1235 = vmatpush1.msra.mxu0 0.0
        %1236 = vmatprep.subr.mxu0 0.0
        %1237 = vmatpush1.msra.mxu0 0.0
        %1238 = vmatprep.subr.mxu0 0.0
        %1239 = vmatpush1.msra.mxu0 0.0
        %1240 = vmatprep.subr.mxu0 0.0
        %1241 = vmatpush1.msra.mxu0 0.0
        %1242 = vmatprep.subr.mxu0 0.0
        %1243 = vmatpush1.msra.mxu0 0.0
        %1244 = vmatprep.subr.mxu0 0.0
        %1245 = vmatpush1.msra.mxu0 0.0
        %1246 = vmatprep.subr.mxu0 %v1219
        %1247 = vmatpush1.msra.mxu0 %v1218
        %1248 = vmatprep.subr.mxu0 %v1217
        %1249 = vmatpush1.msra.mxu0 %v1216
        %1250 = vmatprep.subr.mxu0 %v1215
        %1251 = vmatpush1.msra.mxu0 %v1214
        %1252 = vmatprep.subr.mxu0 %v1213
        %1253 = vmatpush1.msra.mxu0 %v1212
        %1254 = vmatprep.subr.mxu0 %v1211
        %1255 = vmatpush1.msra.mxu0 %v1210
        %1256 = vmatprep.subr.mxu0 %v1209
        %1257 = vmatpush1.msra.mxu0 %v1208
        %1258 = vmatprep.subr.mxu0 %v1207
        %1259 = vmatpush1.msra.mxu0 %v1206
        %1260 = vmatprep.subr.mxu0 %v1205
        %1261 = vmatpush1.msra.mxu0 %v1204
        %1262 = vmatprep.subr.mxu0 0.0
        %1263 = vmatpush2.msra.mxu0 0.0
        %1264 = vmatprep.subr.mxu0 0.0
        %1265 = vmatpush2.msra.mxu0 0.0
        %1266 = vmatprep.subr.mxu0 0.0
        %1267 = vmatpush2.msra.mxu0 0.0
        %1268 = vmatprep.subr.mxu0 0.0
        %1269 = vmatpush2.msra.mxu0 0.0
        %1270 = vmatprep.subr.mxu0 0.0
        %1271 = vmatpush2.msra.mxu0 0.0
        %1272 = vmatprep.subr.mxu0 0.0
        %1273 = vmatpush2.msra.mxu0 0.0
        %1274 = vmatprep.subr.mxu0 0.0
        %1275 = vmatpush2.msra.mxu0 0.0
        %1276 = vmatprep.subr.mxu0 0.0
        %1277 = vmatpush2.msra.mxu0 0.0
        %1278 = vmatprep.subr.mxu0 0.0
        %1279 = vmatpush2.msra.mxu0 0.0
        %1280 = vmatprep.subr.mxu0 0.0
        %1281 = vmatpush2.msra.mxu0 0.0
        %1282 = vmatprep.subr.mxu0 0.0
        %1283 = vmatpush2.msra.mxu0 0.0
        %1284 = vmatprep.subr.mxu0 0.0
        %1285 = vmatpush2.msra.mxu0 0.0
        %1286 = vmatprep.subr.mxu0 0.0
        %1287 = vmatpush2.msra.mxu0 0.0
        %1288 = vmatprep.subr.mxu0 0.0
        %1289 = vmatpush2.msra.mxu0 0.0
        %1290 = vmatprep.subr.mxu0 0.0
        %1291 = vmatpush2.msra.mxu0 0.0
        %1292 = vmatprep.subr.mxu0 0.0
        %1293 = vmatpush2.msra.mxu0 0.0
        %1294 = vmatprep.mubr.f32.mxu0 0.0
        %1295 = vmatmul.mubr.f32.gmra.mxu0 %v1228
        %v1296 = vpop.f32.mrf.mxu0
        %v1297 = vadd.f32 %v1224, %v1296
        %v1298 = vpop.f32.mrf.mxu0
        %v1299 = vadd.f32 %v1224, %v1298
        %1300 = vdwg.mxu0
        %v1301 = vld [vmem:[%s14] sm:$0xff]
        %v1303 = vsel %vm819, %v1301, 0
        %1305 = vmatprep.subr.mxu0 0.0
        %1306 = vmatpush1.msra.mxu0 0.0
        %1307 = vmatprep.subr.mxu0 0.0
        %1308 = vmatpush1.msra.mxu0 0.0
        %1309 = vmatprep.subr.mxu0 0.0
        %1310 = vmatpush1.msra.mxu0 0.0
        %1311 = vmatprep.subr.mxu0 0.0
        %1312 = vmatpush1.msra.mxu0 0.0
        %1313 = vmatprep.subr.mxu0 0.0
        %1314 = vmatpush1.msra.mxu0 0.0
        %1315 = vmatprep.subr.mxu0 0.0
        %1316 = vmatpush1.msra.mxu0 0.0
        %1317 = vmatprep.subr.mxu0 0.0
        %1318 = vmatpush1.msra.mxu0 0.0
        %1319 = vmatprep.subr.mxu0 0.0
        %1320 = vmatpush1.msra.mxu0 0.0
        %1321 = vmatprep.subr.mxu0 0.0
        %1322 = vmatpush1.msra.mxu0 0.0
        %1323 = vmatprep.subr.mxu0 0.0
        %1324 = vmatpush1.msra.mxu0 0.0
        %1325 = vmatprep.subr.mxu0 0.0
        %1326 = vmatpush1.msra.mxu0 0.0
        %1327 = vmatprep.subr.mxu0 0.0
        %1328 = vmatpush1.msra.mxu0 0.0
        %1329 = vmatprep.subr.mxu0 0.0
        %1330 = vmatpush1.msra.mxu0 0.0
        %1331 = vmatprep.subr.mxu0 0.0
        %1332 = vmatpush1.msra.mxu0 0.0
        %1333 = vmatprep.subr.mxu0 0.0
        %1334 = vmatpush1.msra.mxu0 0.0
        %1335 = vmatprep.subr.mxu0 %v1299
        %1336 = vmatpush1.msra.mxu0 %v1297
        %1337 = vmatprep.subr.mxu0 0.0
        %1338 = vmatpush2.msra.mxu0 0.0
        %1339 = vmatprep.subr.mxu0 0.0
        %1340 = vmatpush2.msra.mxu0 0.0
        %1341 = vmatprep.subr.mxu0 0.0
        %1342 = vmatpush2.msra.mxu0 0.0
        %1343 = vmatprep.subr.mxu0 0.0
        %1344 = vmatpush2.msra.mxu0 0.0
        %1345 = vmatprep.subr.mxu0 0.0
        %1346 = vmatpush2.msra.mxu0 0.0
        %1347 = vmatprep.subr.mxu0 0.0
        %1348 = vmatpush2.msra.mxu0 0.0
        %1349 = vmatprep.subr.mxu0 0.0
        %1350 = vmatpush2.msra.mxu0 0.0
        %1351 = vmatprep.subr.mxu0 0.0
        %1352 = vmatpush2.msra.mxu0 0.0
        %1353 = vmatprep.subr.mxu0 0.0
        %1354 = vmatpush2.msra.mxu0 0.0
        %1355 = vmatprep.subr.mxu0 0.0
        %1356 = vmatpush2.msra.mxu0 0.0
        %1357 = vmatprep.subr.mxu0 0.0
        %1358 = vmatpush2.msra.mxu0 0.0
        %1359 = vmatprep.subr.mxu0 0.0
        %1360 = vmatpush2.msra.mxu0 0.0
        %1361 = vmatprep.subr.mxu0 0.0
        %1362 = vmatpush2.msra.mxu0 0.0
        %1363 = vmatprep.subr.mxu0 0.0
        %1364 = vmatpush2.msra.mxu0 0.0
        %1365 = vmatprep.subr.mxu0 0.0
        %1366 = vmatpush2.msra.mxu0 0.0
        %1367 = vmatprep.subr.mxu0 0.0
        %1368 = vmatpush2.msra.mxu0 0.0
        %1369 = vmatprep.mubr.f32.mxu0 0.0
        %1370 = vmatmul.mubr.f32.gmra.mxu0 %v1303
        %v1371 = vpop.f32.mrf.mxu0
        %v1372 = vadd.f32 0.0, %v1371
        %v1373 = vpop.f32.mrf.mxu0
        %v1374 = vadd.f32 0.0, %v1373
        %1375 = vdwg.mxu0
        %v1376 = vadd.f32 %v1122, %v1372
        %v1377 = vadd.f32 %v1124, %v1374
        %v1378 = vmax.f32 %v1376, 0.0
        %v1379 = vmax.f32 %v1377, 0.0
        %v1380 = vld [vmem:[%s15] sm:$0xff]
        %1382 = vset.pattern.permute.xlu0 0
        %1383 = vperm.xlu0 %1382, %v1380
        %v1384 = vpop.permute.xlu0 %1383
        %v1386 = vmul.f32 %v1378, %v1384
        %v1387 = vmul.f32 %v1379, %v1384
        %v1388 = vld [vmem:[%s16] sm:$0xff]
        %1390 = vset.pattern.permute.xlu0 0
        %1391 = vperm.xlu0 %1390, %v1388
        %v1392 = vpop.permute.xlu0 %1391
        %v1394 = vadd.f32 %v1386, %v1392
        %v1395 = vadd.f32 %v1387, %v1392
        %v1396 = vld [vmem:[%s17] sm:$0xf]
        %v1397 = vld [vmem:[%s18] sm:$0xf]
        %1399 = vset.pattern.permute.xlu0 0
        %1400 = vperm.xlu0 %1399, %v1397
        %v1401 = vpop.permute.xlu0 %1400
        %v1404 = vsel %vm819, %v1396, 0
        %1406 = vmatprep.subr.mxu0 0.0
        %1407 = vmatpush1.msra.mxu0 0.0
        %1408 = vmatprep.subr.mxu0 0.0
        %1409 = vmatpush1.msra.mxu0 0.0
        %1410 = vmatprep.subr.mxu0 0.0
        %1411 = vmatpush1.msra.mxu0 0.0
        %1412 = vmatprep.subr.mxu0 0.0
        %1413 = vmatpush1.msra.mxu0 0.0
        %1414 = vmatprep.subr.mxu0 0.0
        %1415 = vmatpush1.msra.mxu0 0.0
        %1416 = vmatprep.subr.mxu0 0.0
        %1417 = vmatpush1.msra.mxu0 0.0
        %1418 = vmatprep.subr.mxu0 0.0
        %1419 = vmatpush1.msra.mxu0 0.0
        %1420 = vmatprep.subr.mxu0 0.0
        %1421 = vmatpush1.msra.mxu0 0.0
        %1422 = vmatprep.subr.mxu0 0.0
        %1423 = vmatpush1.msra.mxu0 0.0
        %1424 = vmatprep.subr.mxu0 0.0
        %1425 = vmatpush1.msra.mxu0 0.0
        %1426 = vmatprep.subr.mxu0 0.0
        %1427 = vmatpush1.msra.mxu0 0.0
        %1428 = vmatprep.subr.mxu0 0.0
        %1429 = vmatpush1.msra.mxu0 0.0
        %1430 = vmatprep.subr.mxu0 0.0
        %1431 = vmatpush1.msra.mxu0 0.0
        %1432 = vmatprep.subr.mxu0 0.0
        %1433 = vmatpush1.msra.mxu0 0.0
        %1434 = vmatprep.subr.mxu0 0.0
        %1435 = vmatpush1.msra.mxu0 0.0
        %1436 = vmatprep.subr.mxu0 %v1395
        %1437 = vmatpush1.msra.mxu0 %v1394
        %1438 = vmatprep.subr.mxu0 0.0
        %1439 = vmatpush2.msra.mxu0 0.0
        %1440 = vmatprep.subr.mxu0 0.0
        %1441 = vmatpush2.msra.mxu0 0.0
        %1442 = vmatprep.subr.mxu0 0.0
        %1443 = vmatpush2.msra.mxu0 0.0
        %1444 = vmatprep.subr.mxu0 0.0
        %1445 = vmatpush2.msra.mxu0 0.0
        %1446 = vmatprep.subr.mxu0 0.0
        %1447 = vmatpush2.msra.mxu0 0.0
        %1448 = vmatprep.subr.mxu0 0.0
        %1449 = vmatpush2.msra.mxu0 0.0
        %1450 = vmatprep.subr.mxu0 0.0
        %1451 = vmatpush2.msra.mxu0 0.0
        %1452 = vmatprep.subr.mxu0 0.0
        %1453 = vmatpush2.msra.mxu0 0.0
        %1454 = vmatprep.subr.mxu0 0.0
        %1455 = vmatpush2.msra.mxu0 0.0
        %1456 = vmatprep.subr.mxu0 0.0
        %1457 = vmatpush2.msra.mxu0 0.0
        %1458 = vmatprep.subr.mxu0 0.0
        %1459 = vmatpush2.msra.mxu0 0.0
        %1460 = vmatprep.subr.mxu0 0.0
        %1461 = vmatpush2.msra.mxu0 0.0
        %1462 = vmatprep.subr.mxu0 0.0
        %1463 = vmatpush2.msra.mxu0 0.0
        %1464 = vmatprep.subr.mxu0 0.0
        %1465 = vmatpush2.msra.mxu0 0.0
        %1466 = vmatprep.subr.mxu0 0.0
        %1467 = vmatpush2.msra.mxu0 0.0
        %1468 = vmatprep.subr.mxu0 0.0
        %1469 = vmatpush2.msra.mxu0 0.0
        %1470 = vmatprep.mubr.f32.mxu0 0.0
        %1471 = vmatmul.mubr.f32.gmra.mxu0 %v1404
        %v1472 = vpop.f32.mrf.mxu0
        %v1473 = vadd.f32 %v1401, %v1472
        %v1474 = vpop.f32.mrf.mxu0
        %v1475 = vadd.f32 %v1401, %v1474
        %1476 = vdwg.mxu0
        %v1479 = vcombine.low %v1473, %v1475
        %1481 = vst [vmem:[%s636] sm:$0xff] %v1479
        %s1482 = sand.u32 %s456, 1
        %s1483 = scalar_lea.sflag [#allocation4], %s1482
        %s1484 = sand.u32 %s456, 1
        %s1485 = smul.addr %s1484, 8
        %s1486 = scalar_lea.vmem [#allocation5], %s1485
        // Predicated region
        $region101: #{tpu_custom_call.1} parent=95 // pred_check
          %p1487 = pneg %p466
        $region102: #{tpu_custom_call.1} parent=95 // pred_check_branch
          %1489 = sbr.rel (%p1487) target = $region104
        $region103: #{tpu_custom_call.1} parent=95 // pred_region
          %s1491 = ssub.s32 128, 128
          %1492 = vsyncadd %s1483, %s1491
          %s1493 = smul.addr %s34, 2
          %s1494 = smul.addr %s1493, 64
          %s1495 = scalar_lea.hbm %s19, %s1494
          %s1497 = sshll.u32 %s1486, 4
          %s1498 = int_to_ptr.vmem [resolvable:$true] %s1497
          %1500 = dma.vmem_to_hbm [thread:$0]  %s1498, 128, %s1495, %s1483
        $region104: #{tpu_custom_call.1} parent=95 // pred_fallthru
          _
      $region96: #{tpu_custom_call.1} parent=5 // pred_fallthru
        _
      %p1501 = scmp.le.s32.totalorder 2, %s29
      // Predicated region
      $region105: #{tpu_custom_call.1} parent=5 // pred_check
        %p1502 = pneg %p1501
      $region106: #{tpu_custom_call.1} parent=5 // pred_check_branch
        %1504 = sbr.rel (%p1502) target = $region108
      $region107: #{tpu_custom_call.1} parent=5 // pred_region
        %s1505 = ssub.s32 %s29, 2
        // Predicated region
        $region109: #{tpu_custom_call.1} parent=107 // pred_check
          %p1506 = pneg %p472
        $region110: #{tpu_custom_call.1} parent=107 // pred_check_branch
          %1508 = sbr.rel (%p1506) target = $region112
        $region111: #{tpu_custom_call.1} parent=107 // pred_region
          %s1509 = sand.u32 %s457, 1
          %s1510 = scalar_lea.sflag [#allocation4], %s1509
          %s1511 = sand.u32 %s457, 1
          %s1512 = smul.addr %s1511, 8
          %s1513 = scalar_lea.vmem [#allocation5], %s1512
          %1514 = dma.done %s1510, 128
        $region112: #{tpu_custom_call.1} parent=107 // pred_fallthru
          _
      $region108: #{tpu_custom_call.1} parent=5 // pred_fallthru
        _
    $region6: #{tpu_custom_call.1} parent=1 // loop_footer
      %s33 = sadd.s32 1, %s29
    $region7: #{tpu_custom_call.1} parent=1 // loop_footer_branch
      %28 = sbr.rel target = $region3
    $region8: #{tpu_custom_call.1} parent=1 // loop_exit
      _
    %1515 = vsyncpa [#allocation3], 1
    %s1516 = scalar_lea.sflag [#allocation3], 1
    %1517 = vsyncpa %s1516, 1
    %1518 = vsyncpa [#allocation4], 1
    %s1519 = scalar_lea.sflag [#allocation4], 1
    %1520 = vsyncpa %s1519, 1

</llo_original>
